<compile_context>
chip_gen: v7x
topology: tpu7x:2x2x1
jax: 0.10.0
libtpu: 0.0.40
codegen_flags: <defaults>
</compile_context>

<pallas_src>
import jax
import jax.numpy as jnp
from jax import lax
from jax.experimental import pallas as pl
from jax.experimental.pallas import tpu as pltpu


# ----------------------------------------------------------------------------- kernel ---

def _stage_row_taps(get_image, nb, h, col_ref, row_masks):
    """Write the 3 vertically-shifted (SAME zero-padded) row slabs of each image into the
    bf16 im2col scratch: col[b*H:(b+1)*H, ky*wc:(ky+1)*wc] = image rows (y + ky - 1).

    The horizontal taps and the width zero-padding are folded into the banded weights,
    so no lane rolls / lane masks are needed here.
    """
    top_ok, bot_ok = row_masks                      # (H, wc) bool, built once by the caller
    wc = col_ref.shape[1] // 3
    zero = jnp.zeros((h, wc), jnp.float32)
    for b in range(nb):                             # static unroll over images in the slab
        xb = get_image(b)                           # (H, wc) f32
        for ky in range(3):
            if ky == 1:
                xr = xb
            else:
                # XLU sublane roll: row y of xr holds image row y + ky - 1 (wrap masked).
                xr = pltpu.roll(xb, shift=(1 - ky) % h, axis=0)
                xr = jnp.where(top_ok if ky == 0 else bot_ok, xr, zero)
            col_ref[b * h:(b + 1) * h, ky * wc:(ky + 1) * wc] = xr.astype(jnp.bfloat16)


def _basic_block_kernel(x_ref, w1_ref, s1_ref, b1_ref, w2_ref, s2_ref, b2_ref,
                        out_ref, col_ref):
    nb, h, wc = x_ref.shape
    m = nb * h

    # Vertical-boundary masks, hoisted once and shared by both convs.  The masks are
    # per-image (H rows), so the roll of a stacked slab never leaks rows between images.
    row_i = lax.broadcasted_iota(jnp.int32, (h, wc), 0)
    row_masks = (row_i >= 1, row_i <= h - 2)

    # conv1 -> bn1 -> relu   (intermediate never leaves VMEM/vregs)
    _stage_row_taps(lambda b: x_ref[b], nb, h, col_ref, row_masks)
    acc1 = jnp.dot(col_ref[...], w1_ref[...], preferred_element_type=jnp.float32)
    hact = jnp.maximum(acc1 * s1_ref[...] + b1_ref[...], 0.0)

    # conv2 -> bn2 -> +residual -> relu
    _stage_row_taps(lambda b: hact[b * h:(b + 1) * h, :], nb, h, col_ref, row_masks)
    acc2 = jnp.dot(col_ref[...], w2_ref[...], preferred_element_type=jnp.float32)
    residual = x_ref[...].reshape(m, wc)                          # f32 residual path
    y = jnp.maximum(acc2 * s2_ref[...] + b2_ref[...] + residual, 0.0)
    out_ref[...] = y.reshape(out_ref.shape).astype(out_ref.dtype)


# ------------------------------------------------------------ one-time parameter prep ---

def _banded_weights(w_oihw, W):
    """(Cout, Cin, 3, 3) -> (3*W*Cin, W*Cout) bf16.

    Row-taps (ky) stacked along K; the 3 horizontal taps + SAME width zero-padding are
    folded into a banded (block tri-diagonal over width) matrix per row-tap.
    """
    cout, cin = w_oihw.shape[0], w_oihw.shape[1]
    w = jnp.transpose(w_oihw, (2, 3, 1, 0)).astype(jnp.float32)         # (ky, kx, cin, cout)
    # shift[kx, x_in, x_out] = 1 iff x_in == x_out + kx - 1 (out-of-range taps drop out).
    shift = jnp.stack([jnp.eye(W, k=1 - kx, dtype=jnp.float32) for kx in range(3)])
    wb = jnp.einsum('kxy,jkcp->jxcyp', shift, w)                        # (ky, x_in, c, x_out, p)
    return wb.reshape(3 * W * cin, W * cout).astype(jnp.bfloat16)


def _fold_bn_lane_dense(gamma, beta, mean, var, W, eps=1e-5):
    scale = (gamma / jnp.sqrt(var + eps)).astype(jnp.float32)
    bias = (beta - mean * scale).astype(jnp.float32)
    # Tile per-channel params across W so they broadcast over (M, W*C) lanes.
    return jnp.tile(scale, W)[None, :], jnp.tile(bias, W)[None, :]


def prepare_basic_block_params(params, W, eps=1e-5):
    """One-time (parameter-load-time) preprocessing.  Do NOT call per forward pass."""
    planes, cin = params["conv1_w"].shape[0], params["conv1_w"].shape[1]
    assert planes == cin, "stride=1 / downsample=None requires inplanes == planes"
    s1, b1 = _fold_bn_lane_dense(params["bn1_gamma"], params["bn1_beta"],
                                 params["bn1_mean"], params["bn1_var"], W, eps)
    s2, b2 = _fold_bn_lane_dense(params["bn2_gamma"], params["bn2_beta"],
                                 params["bn2_mean"], params["bn2_var"], W, eps)
    return {
        "w1": _banded_weights(params["conv1_w"], W),
        "w2": _banded_weights(params["conv2_w"], W),
        "s1": s1, "b1": b1, "s2": s2, "b2": b2,
        "W": W, "planes": planes,
    }


# --------------------------------------------------------------------------- wrappers ---

def _pick_images_per_step(N, H, target_rows=256, max_rows=512):
    """Largest divisor Nb of N with Nb*H <= target_rows (fill MXU rows / amortize per-step
    overhead), while keeping >= 2 grid steps when the batch allows (v7x pipelining)."""
    divisors = [d for d in range(1, N + 1) if N % d == 0]
    fits = [d for d in divisors if d * H <= max_rows] or [1]
    under = [d for d in fits if d * H <= target_rows]
    best = max(under) if under else min(fits)
    if N // best < 2:
        smaller = [d for d in fits if N // d >= 2]
        if smaller:
            best = max(smaller)
    return best


def basic_block_forward_lane_dense(x_lane, prep, *, images_per_step=None):
    """Hot-path entry point.  x_lane: (N, H, W*C) f32 lane-dense activations.
    Keep this layout between ResNet blocks to avoid NCHW transposes in the hot path."""
    N, H, wc = x_lane.shape
    assert H % 8 == 0 and wc % 128 == 0, "lane-dense layout needs H%8==0 and (W*C)%128==0"
    assert prep["w1"].shape == (3 * wc, wc), "prepared weights do not match activation layout"

    nb = images_per_step or _pick_images_per_step(N, H)
    assert N % nb == 0
    grid = (N // nb,)

    # True matmul work actually issued (not the zero-padded/inflated estimate).
    flops = 2 * 2 * N * H * (3 * wc) * wc
    bytes_accessed = (2 * N * H * wc * 4            # x in + out (f32)
                      + 2 * 3 * wc * wc * 2         # banded weights (bf16)
                      + 4 * wc * 4)                 # folded BN scale/bias (f32)

    return pl.pallas_call(
        _basic_block_kernel,
        out_shape=jax.ShapeDtypeStruct((N, H, wc), jnp.float32),
        grid_spec=pltpu.PrefetchScalarGridSpec(
            num_scalar_prefetch=0,
            grid=grid,
            in_specs=[
                pl.BlockSpec((nb, H, wc), lambda n: (n, 0, 0)),       # x (lane-dense slab)
                pl.BlockSpec((3 * wc, wc), lambda n: (0, 0)),         # w1 (resident)
                pl.BlockSpec((1, wc), lambda n: (0, 0)),              # bn1 scale
                pl.BlockSpec((1, wc), lambda n: (0, 0)),              # bn1 bias
                pl.BlockSpec((3 * wc, wc), lambda n: (0, 0)),         # w2 (resident)
                pl.BlockSpec((1, wc), lambda n: (0, 0)),              # bn2 scale
                pl.BlockSpec((1, wc), lambda n: (0, 0)),              # bn2 bias
            ],
            out_specs=pl.BlockSpec((nb, H, wc), lambda n: (n, 0, 0)),
            scratch_shapes=[pltpu.VMEM((nb * H, 3 * wc), jnp.bfloat16)],   # im2col staging
        ),
        compiler_params=pltpu.CompilerParams(
            dimension_semantics=("parallel",),       # shards the batch across v7x's 2 TCs
            vmem_limit_bytes=32 * 1024 * 1024,
        ),
        cost_estimate=pl.CostEstimate(flops=flops, transcendentals=0,
                                      bytes_accessed=bytes_accessed),
    )(x_lane.astype(jnp.float32), prep["w1"], prep["s1"], prep["b1"],
      prep["w2"], prep["s2"], prep["b2"])


def basic_block_forward(x_nchw, prep):
    """Convenience NCHW entry point (layout change done here once; a full ResNet should
    stay lane-dense between blocks and call basic_block_forward_lane_dense directly)."""
    N, C, H, W = x_nchw.shape
    planes = prep["planes"]
    assert W == prep["W"] and planes == C
    x = jnp.transpose(x_nchw, (0, 2, 3, 1)).reshape(N, H, W * C).astype(jnp.float32)
    out = basic_block_forward_lane_dense(x, prep)
    return jnp.transpose(out.reshape(N, H, W, planes), (0, 3, 1, 2))


# -------------------------------------------------------------------------- reference ---

def reference_forward(x_nchw, params, eps=1e-5):
    """Pure-JAX f32 reference (inference-mode BN), matching the PyTorch module."""
    def conv(x, w_oihw):
        w_hwio = jnp.transpose(w_oihw, (2, 3, 1, 0))
        return lax.conv_general_dilated(
            x, w_hwio, window_strides=(1, 1), padding="SAME",
            dimension_numbers=("NHWC", "HWIO", "NHWC"))

    def bn(x, g, b, m, v):
        return (x - m) / jnp.sqrt(v + eps) * g + b

    x = jnp.transpose(x_nchw, (0, 2, 3, 1)).astype(jnp.float32)
    h = jax.nn.relu(bn(conv(x, params["conv1_w"]),
                       params["bn1_gamma"], params["bn1_beta"],
                       params["bn1_mean"], params["bn1_var"]))
    o = bn(conv(h, params["conv2_w"]),
           params["bn2_gamma"], params["bn2_beta"],
           params["bn2_mean"], params["bn2_var"])
    o = jax.nn.relu(o + x)
    return jnp.transpose(o, (0, 3, 1, 2))


# ------------------------------------------------------------------------------- main ---

if __name__ == "__main__":
    # BasicBlock(inplanes=8, planes=8, stride=1); lane-dense W*C = 16*8 = 128.
    # N=16 -> Nb=8 images/step (M = Nb*H = 128 MXU rows), grid = (2,).
    N, C, H, W = 16, 8, 16, 16
    planes = C

    key = jax.random.PRNGKey(0)
    keys = jax.random.split(key, 11)

    params = {
        "conv1_w":  0.1 * jax.random.normal(keys[0], (planes, C, 3, 3), jnp.float32),
        "conv2_w":  0.1 * jax.random.normal(keys[1], (planes, planes, 3, 3), jnp.float32),
        "bn1_gamma": 1.0 + 0.1 * jax.random.normal(keys[2], (planes,), jnp.float32),
        "bn1_beta":  0.1 * jax.random.normal(keys[3], (planes,), jnp.float32),
        "bn1_mean":  0.1 * jax.random.normal(keys[4], (planes,), jnp.float32),
        "bn1_var":   0.5 + jax.random.uniform(keys[5], (planes,), jnp.float32),
        "bn2_gamma": 1.0 + 0.1 * jax.random.normal(keys[6], (planes,), jnp.float32),
        "bn2_beta":  0.1 * jax.random.normal(keys[7], (planes,), jnp.float32),
        "bn2_mean":  0.1 * jax.random.normal(keys[8], (planes,), jnp.float32),
        "bn2_var":   0.5 + jax.random.uniform(keys[9], (planes,), jnp.float32),
    }

    x = jax.random.normal(keys[10], (N, C, H, W), jnp.float32)

    prep = prepare_basic_block_params(params, W)        # one-time, parameter-load time
    out = jax.block_until_ready(basic_block_forward(x, prep))
    ref = jax.block_until_ready(reference_forward(x, params))

    assert out.shape == (N, planes, H, W)
    max_diff = float(jnp.max(jnp.abs(out - ref)))
    # bf16 matmul operands -> tolerance loosened vs. an all-f32 version.
    assert jnp.allclose(out, ref, atol=3e-2, rtol=3e-2), f"max abs diff = {max_diff}"

    print("KERNEL_OK")
</pallas_src>

<mosaic_0001>
module attributes {stable_mosaic.version = 11 : i64} {
  func.func @_basic_block_kernel(%arg0: i32, %arg1: memref<8x16x128xf32, #tpu.memory_space<vmem>>, %arg2: memref<384x128xbf16, #tpu.memory_space<vmem>>, %arg3: memref<1x128xf32, #tpu.memory_space<vmem>>, %arg4: memref<1x128xf32, #tpu.memory_space<vmem>>, %arg5: memref<384x128xbf16, #tpu.memory_space<vmem>>, %arg6: memref<1x128xf32, #tpu.memory_space<vmem>>, %arg7: memref<1x128xf32, #tpu.memory_space<vmem>>, %arg8: memref<8x16x128xf32, #tpu.memory_space<vmem>>, %arg9: memref<128x384xbf16, #tpu.memory_space<vmem>>) attributes {dimension_semantics = [#tpu.dimension_semantics<parallel>], iteration_bounds = array<i64: 2>, scalar_prefetch = 0 : i64, scratch_operands = 1 : i64, tpu.core_type = #tpu.core_type<tc>, window_params = [{transform_indices = @transform_0, window_bounds = array<i64: 8, 16, 128>}, {pipeline_mode = #tpu.pipeline_mode<synchronous>, transform_indices = @transform_1, window_bounds = array<i64: 384, 128>}, {pipeline_mode = #tpu.pipeline_mode<synchronous>, transform_indices = @transform_2, window_bounds = array<i64: 1, 128>}, {pipeline_mode = #tpu.pipeline_mode<synchronous>, transform_indices = @transform_3, window_bounds = array<i64: 1, 128>}, {pipeline_mode = #tpu.pipeline_mode<synchronous>, transform_indices = @transform_4, window_bounds = array<i64: 384, 128>}, {pipeline_mode = #tpu.pipeline_mode<synchronous>, transform_indices = @transform_5, window_bounds = array<i64: 1, 128>}, {pipeline_mode = #tpu.pipeline_mode<synchronous>, transform_indices = @transform_6, window_bounds = array<i64: 1, 128>}, {transform_indices = @transform_7, window_bounds = array<i64: 8, 16, 128>}]} {
    %0 = tpu.iota {dimensions = array<i32: 0>} : vector<16x128xi32>
    %c1_i32 = arith.constant 1 : i32
    %1 = vector.broadcast %c1_i32 : i32 to vector<16x128xi32>
    %2 = arith.cmpi sge, %0, %1 : vector<16x128xi32>
    %c14_i32 = arith.constant 14 : i32
    %3 = vector.broadcast %c14_i32 : i32 to vector<16x128xi32>
    %4 = arith.cmpi sle, %0, %3 : vector<16x128xi32>
    %cst = arith.constant 0.000000e+00 : f32
    %5 = vector.broadcast %cst : f32 to vector<16x128xf32>
    %c0 = arith.constant 0 : index
    %c0_0 = arith.constant 0 : index
    %c0_1 = arith.constant 0 : index
    %6 = vector.load %arg1[%c0, %c0_0, %c0_1] : memref<8x16x128xf32, #tpu.memory_space<vmem>>, vector<1x16x128xf32>
    %7 = vector.shape_cast %6 : vector<1x16x128xf32> to vector<16x128xf32>
    %c1_i32_2 = arith.constant 1 : i32
    %8 = tpu.dynamic_rotate %7 by %c1_i32_2 dim 0 : vector<16x128xf32>, i32 -> vector<16x128xf32>
    %9 = arith.select %2, %8, %5 : vector<16x128xi1>, vector<16x128xf32>
    %10 = arith.truncf %9 : vector<16x128xf32> to vector<16x128xbf16>
    %c0_3 = arith.constant 0 : index
    %c0_4 = arith.constant 0 : index
    %11 = vector.load %arg9[%c0_3, %c0_4] : memref<128x384xbf16, #tpu.memory_space<vmem>>, vector<16x128xbf16>
    tpu.vector_store %arg9[%c0_3, %c0_4], %10 {strides = array<i32>} : memref<128x384xbf16, #tpu.memory_space<vmem>>, vector<16x128xbf16>,
    %12 = arith.truncf %7 : vector<16x128xf32> to vector<16x128xbf16>
    %c0_5 = arith.constant 0 : index
    %c128 = arith.constant 128 : index
    %13 = vector.load %arg9[%c0_5, %c128] : memref<128x384xbf16, #tpu.memory_space<vmem>>, vector<16x128xbf16>
    tpu.vector_store %arg9[%c0_5, %c128], %12 {strides = array<i32>} : memref<128x384xbf16, #tpu.memory_space<vmem>>, vector<16x128xbf16>,
    %c15_i32 = arith.constant 15 : i32
    %14 = tpu.dynamic_rotate %7 by %c15_i32 dim 0 : vector<16x128xf32>, i32 -> vector<16x128xf32>
    %15 = arith.select %4, %14, %5 : vector<16x128xi1>, vector<16x128xf32>
    %16 = arith.truncf %15 : vector<16x128xf32> to vector<16x128xbf16>
    %c0_6 = arith.constant 0 : index
    %c256 = arith.constant 256 : index
    %17 = vector.load %arg9[%c0_6, %c256] : memref<128x384xbf16, #tpu.memory_space<vmem>>, vector<16x128xbf16>
    tpu.vector_store %arg9[%c0_6, %c256], %16 {strides = array<i32>} : memref<128x384xbf16, #tpu.memory_space<vmem>>, vector<16x128xbf16>,
    %c1 = arith.constant 1 : index
    %c0_7 = arith.constant 0 : index
    %c0_8 = arith.constant 0 : index
    %18 = vector.load %arg1[%c1, %c0_7, %c0_8] : memref<8x16x128xf32, #tpu.memory_space<vmem>>, vector<1x16x128xf32>
    %19 = vector.shape_cast %18 : vector<1x16x128xf32> to vector<16x128xf32>
    %c1_i32_9 = arith.constant 1 : i32
    %20 = tpu.dynamic_rotate %19 by %c1_i32_9 dim 0 : vector<16x128xf32>, i32 -> vector<16x128xf32>
    %21 = arith.select %2, %20, %5 : vector<16x128xi1>, vector<16x128xf32>
    %22 = arith.truncf %21 : vector<16x128xf32> to vector<16x128xbf16>
    %c16 = arith.constant 16 : index
    %c0_10 = arith.constant 0 : index
    %23 = vector.load %arg9[%c16, %c0_10] : memref<128x384xbf16, #tpu.memory_space<vmem>>, vector<16x128xbf16>
    tpu.vector_store %arg9[%c16, %c0_10], %22 {strides = array<i32>} : memref<128x384xbf16, #tpu.memory_space<vmem>>, vector<16x128xbf16>,
    %24 = arith.truncf %19 : vector<16x128xf32> to vector<16x128xbf16>
    %c16_11 = arith.constant 16 : index
    %c128_12 = arith.constant 128 : index
    %25 = vector.load %arg9[%c16_11, %c128_12] : memref<128x384xbf16, #tpu.memory_space<vmem>>, vector<16x128xbf16>
    tpu.vector_store %arg9[%c16_11, %c128_12], %24 {strides = array<i32>} : memref<128x384xbf16, #tpu.memory_space<vmem>>, vector<16x128xbf16>,
    %c15_i32_13 = arith.constant 15 : i32
    %26 = tpu.dynamic_rotate %19 by %c15_i32_13 dim 0 : vector<16x128xf32>, i32 -> vector<16x128xf32>
    %27 = arith.select %4, %26, %5 : vector<16x128xi1>, vector<16x128xf32>
    %28 = arith.truncf %27 : vector<16x128xf32> to vector<16x128xbf16>
    %c16_14 = arith.constant 16 : index
    %c256_15 = arith.constant 256 : index
    %29 = vector.load %arg9[%c16_14, %c256_15] : memref<128x384xbf16, #tpu.memory_space<vmem>>, vector<16x128xbf16>
    tpu.vector_store %arg9[%c16_14, %c256_15], %28 {strides = array<i32>} : memref<128x384xbf16, #tpu.memory_space<vmem>>, vector<16x128xbf16>,
    %c2 = arith.constant 2 : index
    %c0_16 = arith.constant 0 : index
    %c0_17 = arith.constant 0 : index
    %30 = vector.load %arg1[%c2, %c0_16, %c0_17] : memref<8x16x128xf32, #tpu.memory_space<vmem>>, vector<1x16x128xf32>
    %31 = vector.shape_cast %30 : vector<1x16x128xf32> to vector<16x128xf32>
    %c1_i32_18 = arith.constant 1 : i32
    %32 = tpu.dynamic_rotate %31 by %c1_i32_18 dim 0 : vector<16x128xf32>, i32 -> vector<16x128xf32>
    %33 = arith.select %2, %32, %5 : vector<16x128xi1>, vector<16x128xf32>
    %34 = arith.truncf %33 : vector<16x128xf32> to vector<16x128xbf16>
    %c32 = arith.constant 32 : index
    %c0_19 = arith.constant 0 : index
    %35 = vector.load %arg9[%c32, %c0_19] : memref<128x384xbf16, #tpu.memory_space<vmem>>, vector<16x128xbf16>
    tpu.vector_store %arg9[%c32, %c0_19], %34 {strides = array<i32>} : memref<128x384xbf16, #tpu.memory_space<vmem>>, vector<16x128xbf16>,
    %36 = arith.truncf %31 : vector<16x128xf32> to vector<16x128xbf16>
    %c32_20 = arith.constant 32 : index
    %c128_21 = arith.constant 128 : index
    %37 = vector.load %arg9[%c32_20, %c128_21] : memref<128x384xbf16, #tpu.memory_space<vmem>>, vector<16x128xbf16>
    tpu.vector_store %arg9[%c32_20, %c128_21], %36 {strides = array<i32>} : memref<128x384xbf16, #tpu.memory_space<vmem>>, vector<16x128xbf16>,
    %c15_i32_22 = arith.constant 15 : i32
    %38 = tpu.dynamic_rotate %31 by %c15_i32_22 dim 0 : vector<16x128xf32>, i32 -> vector<16x128xf32>
    %39 = arith.select %4, %38, %5 : vector<16x128xi1>, vector<16x128xf32>
    %40 = arith.truncf %39 : vector<16x128xf32> to vector<16x128xbf16>
    %c32_23 = arith.constant 32 : index
    %c256_24 = arith.constant 256 : index
    %41 = vector.load %arg9[%c32_23, %c256_24] : memref<128x384xbf16, #tpu.memory_space<vmem>>, vector<16x128xbf16>
    tpu.vector_store %arg9[%c32_23, %c256_24], %40 {strides = array<i32>} : memref<128x384xbf16, #tpu.memory_space<vmem>>, vector<16x128xbf16>,
    %c3 = arith.constant 3 : index
    %c0_25 = arith.constant 0 : index
    %c0_26 = arith.constant 0 : index
    %42 = vector.load %arg1[%c3, %c0_25, %c0_26] : memref<8x16x128xf32, #tpu.memory_space<vmem>>, vector<1x16x128xf32>
    %43 = vector.shape_cast %42 : vector<1x16x128xf32> to vector<16x128xf32>
    %c1_i32_27 = arith.constant 1 : i32
    %44 = tpu.dynamic_rotate %43 by %c1_i32_27 dim 0 : vector<16x128xf32>, i32 -> vector<16x128xf32>
    %45 = arith.select %2, %44, %5 : vector<16x128xi1>, vector<16x128xf32>
    %46 = arith.truncf %45 : vector<16x128xf32> to vector<16x128xbf16>
    %c48 = arith.constant 48 : index
    %c0_28 = arith.constant 0 : index
    %47 = vector.load %arg9[%c48, %c0_28] : memref<128x384xbf16, #tpu.memory_space<vmem>>, vector<16x128xbf16>
    tpu.vector_store %arg9[%c48, %c0_28], %46 {strides = array<i32>} : memref<128x384xbf16, #tpu.memory_space<vmem>>, vector<16x128xbf16>,
    %48 = arith.truncf %43 : vector<16x128xf32> to vector<16x128xbf16>
    %c48_29 = arith.constant 48 : index
    %c128_30 = arith.constant 128 : index
    %49 = vector.load %arg9[%c48_29, %c128_30] : memref<128x384xbf16, #tpu.memory_space<vmem>>, vector<16x128xbf16>
    tpu.vector_store %arg9[%c48_29, %c128_30], %48 {strides = array<i32>} : memref<128x384xbf16, #tpu.memory_space<vmem>>, vector<16x128xbf16>,
    %c15_i32_31 = arith.constant 15 : i32
    %50 = tpu.dynamic_rotate %43 by %c15_i32_31 dim 0 : vector<16x128xf32>, i32 -> vector<16x128xf32>
    %51 = arith.select %4, %50, %5 : vector<16x128xi1>, vector<16x128xf32>
    %52 = arith.truncf %51 : vector<16x128xf32> to vector<16x128xbf16>
    %c48_32 = arith.constant 48 : index
    %c256_33 = arith.constant 256 : index
    %53 = vector.load %arg9[%c48_32, %c256_33] : memref<128x384xbf16, #tpu.memory_space<vmem>>, vector<16x128xbf16>
    tpu.vector_store %arg9[%c48_32, %c256_33], %52 {strides = array<i32>} : memref<128x384xbf16, #tpu.memory_space<vmem>>, vector<16x128xbf16>,
    %c4 = arith.constant 4 : index
    %c0_34 = arith.constant 0 : index
    %c0_35 = arith.constant 0 : index
    %54 = vector.load %arg1[%c4, %c0_34, %c0_35] : memref<8x16x128xf32, #tpu.memory_space<vmem>>, vector<1x16x128xf32>
    %55 = vector.shape_cast %54 : vector<1x16x128xf32> to vector<16x128xf32>
    %c1_i32_36 = arith.constant 1 : i32
    %56 = tpu.dynamic_rotate %55 by %c1_i32_36 dim 0 : vector<16x128xf32>, i32 -> vector<16x128xf32>
    %57 = arith.select %2, %56, %5 : vector<16x128xi1>, vector<16x128xf32>
    %58 = arith.truncf %57 : vector<16x128xf32> to vector<16x128xbf16>
    %c64 = arith.constant 64 : index
    %c0_37 = arith.constant 0 : index
    %59 = vector.load %arg9[%c64, %c0_37] : memref<128x384xbf16, #tpu.memory_space<vmem>>, vector<16x128xbf16>
    tpu.vector_store %arg9[%c64, %c0_37], %58 {strides = array<i32>} : memref<128x384xbf16, #tpu.memory_space<vmem>>, vector<16x128xbf16>,
    %60 = arith.truncf %55 : vector<16x128xf32> to vector<16x128xbf16>
    %c64_38 = arith.constant 64 : index
    %c128_39 = arith.constant 128 : index
    %61 = vector.load %arg9[%c64_38, %c128_39] : memref<128x384xbf16, #tpu.memory_space<vmem>>, vector<16x128xbf16>
    tpu.vector_store %arg9[%c64_38, %c128_39], %60 {strides = array<i32>} : memref<128x384xbf16, #tpu.memory_space<vmem>>, vector<16x128xbf16>,
    %c15_i32_40 = arith.constant 15 : i32
    %62 = tpu.dynamic_rotate %55 by %c15_i32_40 dim 0 : vector<16x128xf32>, i32 -> vector<16x128xf32>
    %63 = arith.select %4, %62, %5 : vector<16x128xi1>, vector<16x128xf32>
    %64 = arith.truncf %63 : vector<16x128xf32> to vector<16x128xbf16>
    %c64_41 = arith.constant 64 : index
    %c256_42 = arith.constant 256 : index
    %65 = vector.load %arg9[%c64_41, %c256_42] : memref<128x384xbf16, #tpu.memory_space<vmem>>, vector<16x128xbf16>
    tpu.vector_store %arg9[%c64_41, %c256_42], %64 {strides = array<i32>} : memref<128x384xbf16, #tpu.memory_space<vmem>>, vector<16x128xbf16>,
    %c5 = arith.constant 5 : index
    %c0_43 = arith.constant 0 : index
    %c0_44 = arith.constant 0 : index
    %66 = vector.load %arg1[%c5, %c0_43, %c0_44] : memref<8x16x128xf32, #tpu.memory_space<vmem>>, vector<1x16x128xf32>
    %67 = vector.shape_cast %66 : vector<1x16x128xf32> to vector<16x128xf32>
    %c1_i32_45 = arith.constant 1 : i32
    %68 = tpu.dynamic_rotate %67 by %c1_i32_45 dim 0 : vector<16x128xf32>, i32 -> vector<16x128xf32>
    %69 = arith.select %2, %68, %5 : vector<16x128xi1>, vector<16x128xf32>
    %70 = arith.truncf %69 : vector<16x128xf32> to vector<16x128xbf16>
    %c80 = arith.constant 80 : index
    %c0_46 = arith.constant 0 : index
    %71 = vector.load %arg9[%c80, %c0_46] : memref<128x384xbf16, #tpu.memory_space<vmem>>, vector<16x128xbf16>
    tpu.vector_store %arg9[%c80, %c0_46], %70 {strides = array<i32>} : memref<128x384xbf16, #tpu.memory_space<vmem>>, vector<16x128xbf16>,
    %72 = arith.truncf %67 : vector<16x128xf32> to vector<16x128xbf16>
    %c80_47 = arith.constant 80 : index
    %c128_48 = arith.constant 128 : index
    %73 = vector.load %arg9[%c80_47, %c128_48] : memref<128x384xbf16, #tpu.memory_space<vmem>>, vector<16x128xbf16>
    tpu.vector_store %arg9[%c80_47, %c128_48], %72 {strides = array<i32>} : memref<128x384xbf16, #tpu.memory_space<vmem>>, vector<16x128xbf16>,
    %c15_i32_49 = arith.constant 15 : i32
    %74 = tpu.dynamic_rotate %67 by %c15_i32_49 dim 0 : vector<16x128xf32>, i32 -> vector<16x128xf32>
    %75 = arith.select %4, %74, %5 : vector<16x128xi1>, vector<16x128xf32>
    %76 = arith.truncf %75 : vector<16x128xf32> to vector<16x128xbf16>
    %c80_50 = arith.constant 80 : index
    %c256_51 = arith.constant 256 : index
    %77 = vector.load %arg9[%c80_50, %c256_51] : memref<128x384xbf16, #tpu.memory_space<vmem>>, vector<16x128xbf16>
    tpu.vector_store %arg9[%c80_50, %c256_51], %76 {strides = array<i32>} : memref<128x384xbf16, #tpu.memory_space<vmem>>, vector<16x128xbf16>,
    %c6 = arith.constant 6 : index
    %c0_52 = arith.constant 0 : index
    %c0_53 = arith.constant 0 : index
    %78 = vector.load %arg1[%c6, %c0_52, %c0_53] : memref<8x16x128xf32, #tpu.memory_space<vmem>>, vector<1x16x128xf32>
    %79 = vector.shape_cast %78 : vector<1x16x128xf32> to vector<16x128xf32>
    %c1_i32_54 = arith.constant 1 : i32
    %80 = tpu.dynamic_rotate %79 by %c1_i32_54 dim 0 : vector<16x128xf32>, i32 -> vector<16x128xf32>
    %81 = arith.select %2, %80, %5 : vector<16x128xi1>, vector<16x128xf32>
    %82 = arith.truncf %81 : vector<16x128xf32> to vector<16x128xbf16>
    %c96 = arith.constant 96 : index
    %c0_55 = arith.constant 0 : index
    %83 = vector.load %arg9[%c96, %c0_55] : memref<128x384xbf16, #tpu.memory_space<vmem>>, vector<16x128xbf16>
    tpu.vector_store %arg9[%c96, %c0_55], %82 {strides = array<i32>} : memref<128x384xbf16, #tpu.memory_space<vmem>>, vector<16x128xbf16>,
    %84 = arith.truncf %79 : vector<16x128xf32> to vector<16x128xbf16>
    %c96_56 = arith.constant 96 : index
    %c128_57 = arith.constant 128 : index
    %85 = vector.load %arg9[%c96_56, %c128_57] : memref<128x384xbf16, #tpu.memory_space<vmem>>, vector<16x128xbf16>
    tpu.vector_store %arg9[%c96_56, %c128_57], %84 {strides = array<i32>} : memref<128x384xbf16, #tpu.memory_space<vmem>>, vector<16x128xbf16>,
    %c15_i32_58 = arith.constant 15 : i32
    %86 = tpu.dynamic_rotate %79 by %c15_i32_58 dim 0 : vector<16x128xf32>, i32 -> vector<16x128xf32>
    %87 = arith.select %4, %86, %5 : vector<16x128xi1>, vector<16x128xf32>
    %88 = arith.truncf %87 : vector<16x128xf32> to vector<16x128xbf16>
    %c96_59 = arith.constant 96 : index
    %c256_60 = arith.constant 256 : index
    %89 = vector.load %arg9[%c96_59, %c256_60] : memref<128x384xbf16, #tpu.memory_space<vmem>>, vector<16x128xbf16>
    tpu.vector_store %arg9[%c96_59, %c256_60], %88 {strides = array<i32>} : memref<128x384xbf16, #tpu.memory_space<vmem>>, vector<16x128xbf16>,
    %c7 = arith.constant 7 : index
    %c0_61 = arith.constant 0 : index
    %c0_62 = arith.constant 0 : index
    %90 = vector.load %arg1[%c7, %c0_61, %c0_62] : memref<8x16x128xf32, #tpu.memory_space<vmem>>, vector<1x16x128xf32>
    %91 = vector.shape_cast %90 : vector<1x16x128xf32> to vector<16x128xf32>
    %c1_i32_63 = arith.constant 1 : i32
    %92 = tpu.dynamic_rotate %91 by %c1_i32_63 dim 0 : vector<16x128xf32>, i32 -> vector<16x128xf32>
    %93 = arith.select %2, %92, %5 : vector<16x128xi1>, vector<16x128xf32>
    %94 = arith.truncf %93 : vector<16x128xf32> to vector<16x128xbf16>
    %c112 = arith.constant 112 : index
    %c0_64 = arith.constant 0 : index
    %95 = vector.load %arg9[%c112, %c0_64] : memref<128x384xbf16, #tpu.memory_space<vmem>>, vector<16x128xbf16>
    tpu.vector_store %arg9[%c112, %c0_64], %94 {strides = array<i32>} : memref<128x384xbf16, #tpu.memory_space<vmem>>, vector<16x128xbf16>,
    %96 = arith.truncf %91 : vector<16x128xf32> to vector<16x128xbf16>
    %c112_65 = arith.constant 112 : index
    %c128_66 = arith.constant 128 : index
    %97 = vector.load %arg9[%c112_65, %c128_66] : memref<128x384xbf16, #tpu.memory_space<vmem>>, vector<16x128xbf16>
    tpu.vector_store %arg9[%c112_65, %c128_66], %96 {strides = array<i32>} : memref<128x384xbf16, #tpu.memory_space<vmem>>, vector<16x128xbf16>,
    %c15_i32_67 = arith.constant 15 : i32
    %98 = tpu.dynamic_rotate %91 by %c15_i32_67 dim 0 : vector<16x128xf32>, i32 -> vector<16x128xf32>
    %99 = arith.select %4, %98, %5 : vector<16x128xi1>, vector<16x128xf32>
    %100 = arith.truncf %99 : vector<16x128xf32> to vector<16x128xbf16>
    %c112_68 = arith.constant 112 : index
    %c256_69 = arith.constant 256 : index
    %101 = vector.load %arg9[%c112_68, %c256_69] : memref<128x384xbf16, #tpu.memory_space<vmem>>, vector<16x128xbf16>
    tpu.vector_store %arg9[%c112_68, %c256_69], %100 {strides = array<i32>} : memref<128x384xbf16, #tpu.memory_space<vmem>>, vector<16x128xbf16>,
    %c0_70 = arith.constant 0 : index
    %c0_71 = arith.constant 0 : index
    %102 = vector.load %arg9[%c0_70, %c0_71] : memref<128x384xbf16, #tpu.memory_space<vmem>>, vector<128x384xbf16>
    %c0_72 = arith.constant 0 : index
    %c0_73 = arith.constant 0 : index
    %103 = vector.load %arg2[%c0_72, %c0_73] : memref<384x128xbf16, #tpu.memory_space<vmem>>, vector<384x128xbf16>
    %cst_74 = arith.constant dense<0.000000e+00> : vector<128x128xf32>
    %104 = tpu.matmul %102, %103, %cst_74 {dimension_numbers = #tpu.dot_dimension_numbers<[1], [0], [0], [1], [0, 0, 1, 1], [], []>} : vector<128x384xbf16>, vector<384x128xbf16>, vector<128x128xf32> -> vector<128x128xf32>
    %c0_75 = arith.constant 0 : index
    %c0_76 = arith.constant 0 : index
    %105 = vector.load %arg3[%c0_75, %c0_76] : memref<1x128xf32, #tpu.memory_space<vmem>>, vector<1x128xf32>
    %106 = vector.broadcast %105 : vector<1x128xf32> to vector<128x128xf32>
    %107 = arith.mulf %104, %106 : vector<128x128xf32>
    %c0_77 = arith.constant 0 : index
    %c0_78 = arith.constant 0 : index
    %108 = vector.load %arg4[%c0_77, %c0_78] : memref<1x128xf32, #tpu.memory_space<vmem>>, vector<1x128xf32>
    %109 = vector.broadcast %108 : vector<1x128xf32> to vector<128x128xf32>
    %110 = arith.addf %107, %109 : vector<128x128xf32>
    %cst_79 = arith.constant 0.000000e+00 : f32
    %111 = vector.broadcast %cst_79 : f32 to vector<128x128xf32>
    %112 = arith.maximumf %110, %111 : vector<128x128xf32>
    %cst_80 = arith.constant 0.000000e+00 : f32
    %113 = vector.broadcast %cst_80 : f32 to vector<16x128xf32>
    %114 = vector.extract_strided_slice %112 {offsets = [0, 0], sizes = [16, 128], strides = [1, 1]} : vector<128x128xf32> to vector<16x128xf32>
    %c1_i32_81 = arith.constant 1 : i32
    %115 = tpu.dynamic_rotate %114 by %c1_i32_81 dim 0 : vector<16x128xf32>, i32 -> vector<16x128xf32>
    %116 = arith.select %2, %115, %113 : vector<16x128xi1>, vector<16x128xf32>
    %117 = arith.truncf %116 : vector<16x128xf32> to vector<16x128xbf16>
    %c0_82 = arith.constant 0 : index
    %c0_83 = arith.constant 0 : index
    %118 = vector.load %arg9[%c0_82, %c0_83] : memref<128x384xbf16, #tpu.memory_space<vmem>>, vector<16x128xbf16>
    tpu.vector_store %arg9[%c0_82, %c0_83], %117 {strides = array<i32>} : memref<128x384xbf16, #tpu.memory_space<vmem>>, vector<16x128xbf16>,
    %119 = arith.truncf %114 : vector<16x128xf32> to vector<16x128xbf16>
    %c0_84 = arith.constant 0 : index
    %c128_85 = arith.constant 128 : index
    %120 = vector.load %arg9[%c0_84, %c128_85] : memref<128x384xbf16, #tpu.memory_space<vmem>>, vector<16x128xbf16>
    tpu.vector_store %arg9[%c0_84, %c128_85], %119 {strides = array<i32>} : memref<128x384xbf16, #tpu.memory_space<vmem>>, vector<16x128xbf16>,
    %c15_i32_86 = arith.constant 15 : i32
    %121 = tpu.dynamic_rotate %114 by %c15_i32_86 dim 0 : vector<16x128xf32>, i32 -> vector<16x128xf32>
    %122 = arith.select %4, %121, %113 : vector<16x128xi1>, vector<16x128xf32>
    %123 = arith.truncf %122 : vector<16x128xf32> to vector<16x128xbf16>
    %c0_87 = arith.constant 0 : index
    %c256_88 = arith.constant 256 : index
    %124 = vector.load %arg9[%c0_87, %c256_88] : memref<128x384xbf16, #tpu.memory_space<vmem>>, vector<16x128xbf16>
    tpu.vector_store %arg9[%c0_87, %c256_88], %123 {strides = array<i32>} : memref<128x384xbf16, #tpu.memory_space<vmem>>, vector<16x128xbf16>,
    %125 = vector.extract_strided_slice %112 {offsets = [16, 0], sizes = [16, 128], strides = [1, 1]} : vector<128x128xf32> to vector<16x128xf32>
    %c1_i32_89 = arith.constant 1 : i32
    %126 = tpu.dynamic_rotate %125 by %c1_i32_89 dim 0 : vector<16x128xf32>, i32 -> vector<16x128xf32>
    %127 = arith.select %2, %126, %113 : vector<16x128xi1>, vector<16x128xf32>
    %128 = arith.truncf %127 : vector<16x128xf32> to vector<16x128xbf16>
    %c16_90 = arith.constant 16 : index
    %c0_91 = arith.constant 0 : index
    %129 = vector.load %arg9[%c16_90, %c0_91] : memref<128x384xbf16, #tpu.memory_space<vmem>>, vector<16x128xbf16>
    tpu.vector_store %arg9[%c16_90, %c0_91], %128 {strides = array<i32>} : memref<128x384xbf16, #tpu.memory_space<vmem>>, vector<16x128xbf16>,
    %130 = arith.truncf %125 : vector<16x128xf32> to vector<16x128xbf16>
    %c16_92 = arith.constant 16 : index
    %c128_93 = arith.constant 128 : index
    %131 = vector.load %arg9[%c16_92, %c128_93] : memref<128x384xbf16, #tpu.memory_space<vmem>>, vector<16x128xbf16>
    tpu.vector_store %arg9[%c16_92, %c128_93], %130 {strides = array<i32>} : memref<128x384xbf16, #tpu.memory_space<vmem>>, vector<16x128xbf16>,
    %c15_i32_94 = arith.constant 15 : i32
    %132 = tpu.dynamic_rotate %125 by %c15_i32_94 dim 0 : vector<16x128xf32>, i32 -> vector<16x128xf32>
    %133 = arith.select %4, %132, %113 : vector<16x128xi1>, vector<16x128xf32>
    %134 = arith.truncf %133 : vector<16x128xf32> to vector<16x128xbf16>
    %c16_95 = arith.constant 16 : index
    %c256_96 = arith.constant 256 : index
    %135 = vector.load %arg9[%c16_95, %c256_96] : memref<128x384xbf16, #tpu.memory_space<vmem>>, vector<16x128xbf16>
    tpu.vector_store %arg9[%c16_95, %c256_96], %134 {strides = array<i32>} : memref<128x384xbf16, #tpu.memory_space<vmem>>, vector<16x128xbf16>,
    %136 = vector.extract_strided_slice %112 {offsets = [32, 0], sizes = [16, 128], strides = [1, 1]} : vector<128x128xf32> to vector<16x128xf32>
    %c1_i32_97 = arith.constant 1 : i32
    %137 = tpu.dynamic_rotate %136 by %c1_i32_97 dim 0 : vector<16x128xf32>, i32 -> vector<16x128xf32>
    %138 = arith.select %2, %137, %113 : vector<16x128xi1>, vector<16x128xf32>
    %139 = arith.truncf %138 : vector<16x128xf32> to vector<16x128xbf16>
    %c32_98 = arith.constant 32 : index
    %c0_99 = arith.constant 0 : index
    %140 = vector.load %arg9[%c32_98, %c0_99] : memref<128x384xbf16, #tpu.memory_space<vmem>>, vector<16x128xbf16>
    tpu.vector_store %arg9[%c32_98, %c0_99], %139 {strides = array<i32>} : memref<128x384xbf16, #tpu.memory_space<vmem>>, vector<16x128xbf16>,
    %141 = arith.truncf %136 : vector<16x128xf32> to vector<16x128xbf16>
    %c32_100 = arith.constant 32 : index
    %c128_101 = arith.constant 128 : index
    %142 = vector.load %arg9[%c32_100, %c128_101] : memref<128x384xbf16, #tpu.memory_space<vmem>>, vector<16x128xbf16>
    tpu.vector_store %arg9[%c32_100, %c128_101], %141 {strides = array<i32>} : memref<128x384xbf16, #tpu.memory_space<vmem>>, vector<16x128xbf16>,
    %c15_i32_102 = arith.constant 15 : i32
    %143 = tpu.dynamic_rotate %136 by %c15_i32_102 dim 0 : vector<16x128xf32>, i32 -> vector<16x128xf32>
    %144 = arith.select %4, %143, %113 : vector<16x128xi1>, vector<16x128xf32>
    %145 = arith.truncf %144 : vector<16x128xf32> to vector<16x128xbf16>
    %c32_103 = arith.constant 32 : index
    %c256_104 = arith.constant 256 : index
    %146 = vector.load %arg9[%c32_103, %c256_104] : memref<128x384xbf16, #tpu.memory_space<vmem>>, vector<16x128xbf16>
    tpu.vector_store %arg9[%c32_103, %c256_104], %145 {strides = array<i32>} : memref<128x384xbf16, #tpu.memory_space<vmem>>, vector<16x128xbf16>,
    %147 = vector.extract_strided_slice %112 {offsets = [48, 0], sizes = [16, 128], strides = [1, 1]} : vector<128x128xf32> to vector<16x128xf32>
    %c1_i32_105 = arith.constant 1 : i32
    %148 = tpu.dynamic_rotate %147 by %c1_i32_105 dim 0 : vector<16x128xf32>, i32 -> vector<16x128xf32>
    %149 = arith.select %2, %148, %113 : vector<16x128xi1>, vector<16x128xf32>
    %150 = arith.truncf %149 : vector<16x128xf32> to vector<16x128xbf16>
    %c48_106 = arith.constant 48 : index
    %c0_107 = arith.constant 0 : index
    %151 = vector.load %arg9[%c48_106, %c0_107] : memref<128x384xbf16, #tpu.memory_space<vmem>>, vector<16x128xbf16>
    tpu.vector_store %arg9[%c48_106, %c0_107], %150 {strides = array<i32>} : memref<128x384xbf16, #tpu.memory_space<vmem>>, vector<16x128xbf16>,
    %152 = arith.truncf %147 : vector<16x128xf32> to vector<16x128xbf16>
    %c48_108 = arith.constant 48 : index
    %c128_109 = arith.constant 128 : index
    %153 = vector.load %arg9[%c48_108, %c128_109] : memref<128x384xbf16, #tpu.memory_space<vmem>>, vector<16x128xbf16>
    tpu.vector_store %arg9[%c48_108, %c128_109], %152 {strides = array<i32>} : memref<128x384xbf16, #tpu.memory_space<vmem>>, vector<16x128xbf16>,
    %c15_i32_110 = arith.constant 15 : i32
    %154 = tpu.dynamic_rotate %147 by %c15_i32_110 dim 0 : vector<16x128xf32>, i32 -> vector<16x128xf32>
    %155 = arith.select %4, %154, %113 : vector<16x128xi1>, vector<16x128xf32>
    %156 = arith.truncf %155 : vector<16x128xf32> to vector<16x128xbf16>
    %c48_111 = arith.constant 48 : index
    %c256_112 = arith.constant 256 : index
    %157 = vector.load %arg9[%c48_111, %c256_112] : memref<128x384xbf16, #tpu.memory_space<vmem>>, vector<16x128xbf16>
    tpu.vector_store %arg9[%c48_111, %c256_112], %156 {strides = array<i32>} : memref<128x384xbf16, #tpu.memory_space<vmem>>, vector<16x128xbf16>,
    %158 = vector.extract_strided_slice %112 {offsets = [64, 0], sizes = [16, 128], strides = [1, 1]} : vector<128x128xf32> to vector<16x128xf32>
    %c1_i32_113 = arith.constant 1 : i32
    %159 = tpu.dynamic_rotate %158 by %c1_i32_113 dim 0 : vector<16x128xf32>, i32 -> vector<16x128xf32>
    %160 = arith.select %2, %159, %113 : vector<16x128xi1>, vector<16x128xf32>
    %161 = arith.truncf %160 : vector<16x128xf32> to vector<16x128xbf16>
    %c64_114 = arith.constant 64 : index
    %c0_115 = arith.constant 0 : index
    %162 = vector.load %arg9[%c64_114, %c0_115] : memref<128x384xbf16, #tpu.memory_space<vmem>>, vector<16x128xbf16>
    tpu.vector_store %arg9[%c64_114, %c0_115], %161 {strides = array<i32>} : memref<128x384xbf16, #tpu.memory_space<vmem>>, vector<16x128xbf16>,
    %163 = arith.truncf %158 : vector<16x128xf32> to vector<16x128xbf16>
    %c64_116 = arith.constant 64 : index
    %c128_117 = arith.constant 128 : index
    %164 = vector.load %arg9[%c64_116, %c128_117] : memref<128x384xbf16, #tpu.memory_space<vmem>>, vector<16x128xbf16>
    tpu.vector_store %arg9[%c64_116, %c128_117], %163 {strides = array<i32>} : memref<128x384xbf16, #tpu.memory_space<vmem>>, vector<16x128xbf16>,
    %c15_i32_118 = arith.constant 15 : i32
    %165 = tpu.dynamic_rotate %158 by %c15_i32_118 dim 0 : vector<16x128xf32>, i32 -> vector<16x128xf32>
    %166 = arith.select %4, %165, %113 : vector<16x128xi1>, vector<16x128xf32>
    %167 = arith.truncf %166 : vector<16x128xf32> to vector<16x128xbf16>
    %c64_119 = arith.constant 64 : index
    %c256_120 = arith.constant 256 : index
    %168 = vector.load %arg9[%c64_119, %c256_120] : memref<128x384xbf16, #tpu.memory_space<vmem>>, vector<16x128xbf16>
    tpu.vector_store %arg9[%c64_119, %c256_120], %167 {strides = array<i32>} : memref<128x384xbf16, #tpu.memory_space<vmem>>, vector<16x128xbf16>,
    %169 = vector.extract_strided_slice %112 {offsets = [80, 0], sizes = [16, 128], strides = [1, 1]} : vector<128x128xf32> to vector<16x128xf32>
    %c1_i32_121 = arith.constant 1 : i32
    %170 = tpu.dynamic_rotate %169 by %c1_i32_121 dim 0 : vector<16x128xf32>, i32 -> vector<16x128xf32>
    %171 = arith.select %2, %170, %113 : vector<16x128xi1>, vector<16x128xf32>
    %172 = arith.truncf %171 : vector<16x128xf32> to vector<16x128xbf16>
    %c80_122 = arith.constant 80 : index
    %c0_123 = arith.constant 0 : index
    %173 = vector.load %arg9[%c80_122, %c0_123] : memref<128x384xbf16, #tpu.memory_space<vmem>>, vector<16x128xbf16>
    tpu.vector_store %arg9[%c80_122, %c0_123], %172 {strides = array<i32>} : memref<128x384xbf16, #tpu.memory_space<vmem>>, vector<16x128xbf16>,
    %174 = arith.truncf %169 : vector<16x128xf32> to vector<16x128xbf16>
    %c80_124 = arith.constant 80 : index
    %c128_125 = arith.constant 128 : index
    %175 = vector.load %arg9[%c80_124, %c128_125] : memref<128x384xbf16, #tpu.memory_space<vmem>>, vector<16x128xbf16>
    tpu.vector_store %arg9[%c80_124, %c128_125], %174 {strides = array<i32>} : memref<128x384xbf16, #tpu.memory_space<vmem>>, vector<16x128xbf16>,
    %c15_i32_126 = arith.constant 15 : i32
    %176 = tpu.dynamic_rotate %169 by %c15_i32_126 dim 0 : vector<16x128xf32>, i32 -> vector<16x128xf32>
    %177 = arith.select %4, %176, %113 : vector<16x128xi1>, vector<16x128xf32>
    %178 = arith.truncf %177 : vector<16x128xf32> to vector<16x128xbf16>
    %c80_127 = arith.constant 80 : index
    %c256_128 = arith.constant 256 : index
    %179 = vector.load %arg9[%c80_127, %c256_128] : memref<128x384xbf16, #tpu.memory_space<vmem>>, vector<16x128xbf16>
    tpu.vector_store %arg9[%c80_127, %c256_128], %178 {strides = array<i32>} : memref<128x384xbf16, #tpu.memory_space<vmem>>, vector<16x128xbf16>,
    %180 = vector.extract_strided_slice %112 {offsets = [96, 0], sizes = [16, 128], strides = [1, 1]} : vector<128x128xf32> to vector<16x128xf32>
    %c1_i32_129 = arith.constant 1 : i32
    %181 = tpu.dynamic_rotate %180 by %c1_i32_129 dim 0 : vector<16x128xf32>, i32 -> vector<16x128xf32>
    %182 = arith.select %2, %181, %113 : vector<16x128xi1>, vector<16x128xf32>
    %183 = arith.truncf %182 : vector<16x128xf32> to vector<16x128xbf16>
    %c96_130 = arith.constant 96 : index
    %c0_131 = arith.constant 0 : index
    %184 = vector.load %arg9[%c96_130, %c0_131] : memref<128x384xbf16, #tpu.memory_space<vmem>>, vector<16x128xbf16>
    tpu.vector_store %arg9[%c96_130, %c0_131], %183 {strides = array<i32>} : memref<128x384xbf16, #tpu.memory_space<vmem>>, vector<16x128xbf16>,
    %185 = arith.truncf %180 : vector<16x128xf32> to vector<16x128xbf16>
    %c96_132 = arith.constant 96 : index
    %c128_133 = arith.constant 128 : index
    %186 = vector.load %arg9[%c96_132, %c128_133] : memref<128x384xbf16, #tpu.memory_space<vmem>>, vector<16x128xbf16>
    tpu.vector_store %arg9[%c96_132, %c128_133], %185 {strides = array<i32>} : memref<128x384xbf16, #tpu.memory_space<vmem>>, vector<16x128xbf16>,
    %c15_i32_134 = arith.constant 15 : i32
    %187 = tpu.dynamic_rotate %180 by %c15_i32_134 dim 0 : vector<16x128xf32>, i32 -> vector<16x128xf32>
    %188 = arith.select %4, %187, %113 : vector<16x128xi1>, vector<16x128xf32>
    %189 = arith.truncf %188 : vector<16x128xf32> to vector<16x128xbf16>
    %c96_135 = arith.constant 96 : index
    %c256_136 = arith.constant 256 : index
    %190 = vector.load %arg9[%c96_135, %c256_136] : memref<128x384xbf16, #tpu.memory_space<vmem>>, vector<16x128xbf16>
    tpu.vector_store %arg9[%c96_135, %c256_136], %189 {strides = array<i32>} : memref<128x384xbf16, #tpu.memory_space<vmem>>, vector<16x128xbf16>,
    %191 = vector.extract_strided_slice %112 {offsets = [112, 0], sizes = [16, 128], strides = [1, 1]} : vector<128x128xf32> to vector<16x128xf32>
    %c1_i32_137 = arith.constant 1 : i32
    %192 = tpu.dynamic_rotate %191 by %c1_i32_137 dim 0 : vector<16x128xf32>, i32 -> vector<16x128xf32>
    %193 = arith.select %2, %192, %113 : vector<16x128xi1>, vector<16x128xf32>
    %194 = arith.truncf %193 : vector<16x128xf32> to vector<16x128xbf16>
    %c112_138 = arith.constant 112 : index
    %c0_139 = arith.constant 0 : index
    %195 = vector.load %arg9[%c112_138, %c0_139] : memref<128x384xbf16, #tpu.memory_space<vmem>>, vector<16x128xbf16>
    tpu.vector_store %arg9[%c112_138, %c0_139], %194 {strides = array<i32>} : memref<128x384xbf16, #tpu.memory_space<vmem>>, vector<16x128xbf16>,
    %196 = arith.truncf %191 : vector<16x128xf32> to vector<16x128xbf16>
    %c112_140 = arith.constant 112 : index
    %c128_141 = arith.constant 128 : index
    %197 = vector.load %arg9[%c112_140, %c128_141] : memref<128x384xbf16, #tpu.memory_space<vmem>>, vector<16x128xbf16>
    tpu.vector_store %arg9[%c112_140, %c128_141], %196 {strides = array<i32>} : memref<128x384xbf16, #tpu.memory_space<vmem>>, vector<16x128xbf16>,
    %c15_i32_142 = arith.constant 15 : i32
    %198 = tpu.dynamic_rotate %191 by %c15_i32_142 dim 0 : vector<16x128xf32>, i32 -> vector<16x128xf32>
    %199 = arith.select %4, %198, %113 : vector<16x128xi1>, vector<16x128xf32>
    %200 = arith.truncf %199 : vector<16x128xf32> to vector<16x128xbf16>
    %c112_143 = arith.constant 112 : index
    %c256_144 = arith.constant 256 : index
    %201 = vector.load %arg9[%c112_143, %c256_144] : memref<128x384xbf16, #tpu.memory_space<vmem>>, vector<16x128xbf16>
    tpu.vector_store %arg9[%c112_143, %c256_144], %200 {strides = array<i32>} : memref<128x384xbf16, #tpu.memory_space<vmem>>, vector<16x128xbf16>,
    %c0_145 = arith.constant 0 : index
    %c0_146 = arith.constant 0 : index
    %202 = vector.load %arg9[%c0_145, %c0_146] : memref<128x384xbf16, #tpu.memory_space<vmem>>, vector<128x384xbf16>
    %c0_147 = arith.constant 0 : index
    %c0_148 = arith.constant 0 : index
    %203 = vector.load %arg5[%c0_147, %c0_148] : memref<384x128xbf16, #tpu.memory_space<vmem>>, vector<384x128xbf16>
    %cst_149 = arith.constant dense<0.000000e+00> : vector<128x128xf32>
    %204 = tpu.matmul %202, %203, %cst_149 {dimension_numbers = #tpu.dot_dimension_numbers<[1], [0], [0], [1], [0, 0, 1, 1], [], []>} : vector<128x384xbf16>, vector<384x128xbf16>, vector<128x128xf32> -> vector<128x128xf32>
    %c0_150 = arith.constant 0 : index
    %c0_151 = arith.constant 0 : index
    %c0_152 = arith.constant 0 : index
    %205 = vector.load %arg1[%c0_150, %c0_151, %c0_152] : memref<8x16x128xf32, #tpu.memory_space<vmem>>, vector<8x16x128xf32>
    %206 = vector.shape_cast %205 : vector<8x16x128xf32> to vector<128x128xf32>
    %c0_153 = arith.constant 0 : index
    %c0_154 = arith.constant 0 : index
    %207 = vector.load %arg6[%c0_153, %c0_154] : memref<1x128xf32, #tpu.memory_space<vmem>>, vector<1x128xf32>
    %208 = vector.broadcast %207 : vector<1x128xf32> to vector<128x128xf32>
    %209 = arith.mulf %204, %208 : vector<128x128xf32>
    %c0_155 = arith.constant 0 : index
    %c0_156 = arith.constant 0 : index
    %210 = vector.load %arg7[%c0_155, %c0_156] : memref<1x128xf32, #tpu.memory_space<vmem>>, vector<1x128xf32>
    %211 = vector.broadcast %210 : vector<1x128xf32> to vector<128x128xf32>
    %212 = arith.addf %209, %211 : vector<128x128xf32>
    %213 = arith.addf %212, %206 : vector<128x128xf32>
    %cst_157 = arith.constant 0.000000e+00 : f32
    %214 = vector.broadcast %cst_157 : f32 to vector<128x128xf32>
    %215 = arith.maximumf %213, %214 : vector<128x128xf32>
    %216 = vector.shape_cast %215 : vector<128x128xf32> to vector<8x16x128xf32>
    %c0_158 = arith.constant 0 : index
    %c0_159 = arith.constant 0 : index
    %c0_160 = arith.constant 0 : index
    %217 = vector.load %arg8[%c0_158, %c0_159, %c0_160] : memref<8x16x128xf32, #tpu.memory_space<vmem>>, vector<8x16x128xf32>
    tpu.vector_store %arg8[%c0_158, %c0_159, %c0_160], %216 {strides = array<i32>} : memref<8x16x128xf32, #tpu.memory_space<vmem>>, vector<8x16x128xf32>,
    return
  }
  func.func @transform_0(%arg0: i32) -> (i32, i32, i32) {
    %c0_i32 = arith.constant 0 : i32
    %c0_i32_0 = arith.constant 0 : i32
    %c0_i32_1 = arith.constant 0 : i32
    return %arg0, %c0_i32, %c0_i32_0 : i32, i32, i32
  }
  func.func @transform_1(%arg0: i32) -> (i32, i32) {
    %c0_i32 = arith.constant 0 : i32
    %c0_i32_0 = arith.constant 0 : i32
    %c0_i32_1 = arith.constant 0 : i32
    return %c0_i32, %c0_i32_0 : i32, i32
  }
  func.func @transform_2(%arg0: i32) -> (i32, i32) {
    %c0_i32 = arith.constant 0 : i32
    %c0_i32_0 = arith.constant 0 : i32
    %c0_i32_1 = arith.constant 0 : i32
    return %c0_i32, %c0_i32_0 : i32, i32
  }
  func.func @transform_3(%arg0: i32) -> (i32, i32) {
    %c0_i32 = arith.constant 0 : i32
    %c0_i32_0 = arith.constant 0 : i32
    %c0_i32_1 = arith.constant 0 : i32
    return %c0_i32, %c0_i32_0 : i32, i32
  }
  func.func @transform_4(%arg0: i32) -> (i32, i32) {
    %c0_i32 = arith.constant 0 : i32
    %c0_i32_0 = arith.constant 0 : i32
    %c0_i32_1 = arith.constant 0 : i32
    return %c0_i32, %c0_i32_0 : i32, i32
  }
  func.func @transform_5(%arg0: i32) -> (i32, i32) {
    %c0_i32 = arith.constant 0 : i32
    %c0_i32_0 = arith.constant 0 : i32
    %c0_i32_1 = arith.constant 0 : i32
    return %c0_i32, %c0_i32_0 : i32, i32
  }
  func.func @transform_6(%arg0: i32) -> (i32, i32) {
    %c0_i32 = arith.constant 0 : i32
    %c0_i32_0 = arith.constant 0 : i32
    %c0_i32_1 = arith.constant 0 : i32
    return %c0_i32, %c0_i32_0 : i32, i32
  }
  func.func @transform_7(%arg0: i32) -> (i32, i32, i32) {
    %c0_i32 = arith.constant 0 : i32
    %c0_i32_0 = arith.constant 0 : i32
    %c0_i32_1 = arith.constant 0 : i32
    return %arg0, %c0_i32, %c0_i32_0 : i32, i32, i32
  }
}

</mosaic_0001>

<llo_original>
// kernel: tpu_custom_call.1
$region0: #{tpu_custom_call.1}
  #allocation0 [shape = 'u32[]', space=smem, size = 0x4, offset = 0x4, fixed_abs, tag = 'smem constant byte address 0x4 - core index']
  #allocation1 [shape = 'u32[144,128]{1,0:T(1,128)}', space=vmem, size = 0x12000, scoped, tag = 'internal scratch']
  #allocation2 [shape = 'bf16[128,384]{1,0:T(16,128)(2,1)}', space=vmem, size = 0x18000, scoped, tag = 'scratch operand']
  %s0 = inlined_call_operand.hbm [shape: f32[16,16,128], index: 0, kind: input, shape index: {}]
  %s1 = inlined_call_operand.hbm [shape: bf16[384,128], index: 1, kind: input, shape index: {}]
  %s2 = inlined_call_operand.vmem [shape: f32[1,128], index: 2, kind: input, shape index: {}]
  %s3 = inlined_call_operand.vmem [shape: f32[1,128], index: 3, kind: input, shape index: {}]
  %s4 = inlined_call_operand.hbm [shape: bf16[384,128], index: 4, kind: input, shape index: {}]
  %s5 = inlined_call_operand.vmem [shape: f32[1,128], index: 5, kind: input, shape index: {}]
  %s6 = inlined_call_operand.vmem [shape: f32[1,128], index: 6, kind: input, shape index: {}]
  %s7 = inlined_call_operand.hbm [shape: f32[16,16,128], index: 7, kind: output, shape index: {}]
  %s8 = sld [smem:[#allocation0]]
  $region73: #{tpu_custom_call.1} parent=0
    _
  %s10 = ssub.s32 1, %s8
  %s11 = scalar_select 0, %s10, %s8
  $region1: #{tpu_custom_call.1} parent=0
    #allocation3 [shape = 'u8[131072]{0}', space=vmem, size = 0x20000, scoped, tag = 'input window, operand 0']
    #allocation4 [shape = 's32[2]{0}', space=sflag, size = 0x8, scoped, tag = 'scoped memory for tpu_custom_call.1']
    #allocation5 [shape = 's32[2]{0}', space=sflag, size = 0x8, scoped, tag = 'scoped memory for tpu_custom_call.1']
    #allocation6 [shape = 'u8[98304]{0}', space=vmem, size = 0x18000, scoped, tag = 'input window, operand 1, single buffered']
    #allocation7 [shape = 's32[1]{0}', space=sflag, size = 0x4, scoped, tag = 'scoped memory for tpu_custom_call.1']
    #allocation8 [shape = 'u8[98304]{0}', space=vmem, size = 0x18000, scoped, tag = 'input window, operand 4, single buffered']
    #allocation9 [shape = 'u8[131072]{0}', space=vmem, size = 0x20000, scoped, tag = 'output window, operand 0']
    %12 = vsyncpa [#allocation4], 0
    %s13 = scalar_lea.sflag [#allocation4], 1
    %14 = vsyncpa %s13, 0
    %15 = vsyncpa [#allocation7], 0
    %16 = vsyncpa [#allocation5], 0
    %s17 = scalar_lea.sflag [#allocation5], 1
    %18 = vsyncpa %s17, 0
    loop: start=0, step=1, limit=4
    $region2: #{tpu_custom_call.1} parent=1 // loop_pre_header
      _
    $region3: #{tpu_custom_call.1} parent=1 // loop_header
      %s20 = sphi 0, %s24
      %p21 = scmp.ge.s32.totalorder %s20, 4
      %s30 = sphi 0, %s32
      %s33 = sphi 0, %s30
      %s34 = sphi 0, %s33
      %s50 = sphi 0, %s34
      %s54 = sphi 0, %s54
      %s56 = sphi 0, %s54
      %s57 = sphi 0, %s56
      %s71 = sphi 0, %s57
      %s75 = sphi 0, %s75
      %s77 = sphi 0, %s75
      %s78 = sphi 0, %s77
      %s92 = sphi 0, %s78
      %s96 = sphi 0, %s96
      %s98 = sphi 0, %s96
      %s99 = sphi 0, %s98
      %s113 = sphi 0, %s99
      %s117 = sphi 0, %s117
      %s119 = sphi 0, %s117
      %s120 = sphi 0, %s119
      %s134 = sphi 0, %s120
      %s138 = sphi 0, %s138
      %s140 = sphi 0, %s138
      %s141 = sphi 0, %s140
      %s155 = sphi 0, %s141
      %s159 = sphi 0, %s159
      %s161 = sphi 0, %s159
      %s162 = sphi 0, %s161
      %s176 = sphi 0, %s162
      %s182 = sphi 0, %s184
      %s185 = sphi 0, %s182
      %s186 = sphi 0, %s185
      %s202 = sphi 0, %s186
    $region4: #{tpu_custom_call.1} parent=1 // loop_header_branch
      %23 = sbr.rel (%p21) target = $region8
    $region5: #{tpu_custom_call.1} parent=1 // loop_body
      %s25 = ssub.s32 %s20, 1
      %s26 = ssub.s32 %s20, 2
      %s27 = sadd.s32 %s20, 1
      %s28 = ssub.s32 %s20, %s27
      %p29 = scmp.eq.s32.totalorder %s28, 0
      %s31 = sadd.s32 %s30, 1
      %s32 = scalar_select %p29, %s30, %s31
      %p35 = pneg %p29
      %p36 = scmp.eq.s32.totalorder %s20, 1
      %p37 = por %p35, %p36
      %p38 = scmp.ne.s32.totalorder %s30, %s33
      %p39 = scmp.eq.s32.totalorder %s20, 0
      %p40 = por %p38, %p39
      %p41 = scmp.ne.s32.totalorder %s30, %s33
      %p42 = scmp.eq.s32.totalorder %s25, 1
      %p43 = por %p41, %p42
      %p44 = scmp.ne.s32.totalorder %s33, %s34
      %p45 = scmp.eq.s32.totalorder %s25, 0
      %p46 = por %p44, %p45
      %p47 = scmp.ne.s32.totalorder %s33, %s34
      %p48 = scmp.eq.s32.totalorder %s26, 1
      %p49 = por %p47, %p48
      %p51 = scmp.ne.s32.totalorder %s34, %s50
      %p52 = scmp.eq.s32.totalorder %s26, 0
      %p53 = por %p51, %p52
      %s55 = sadd.s32 %s54, 1
      %p58 = scmp.eq.s32.totalorder %s20, 1
      %p59 = scmp.ne.s32.totalorder %s54, %s56
      %p60 = scmp.eq.s32.totalorder %s20, 0
      %p61 = por %p59, %p60
      %p62 = scmp.ne.s32.totalorder %s54, %s56
      %p63 = scmp.eq.s32.totalorder %s25, 1
      %p64 = por %p62, %p63
      %p65 = scmp.ne.s32.totalorder %s56, %s57
      %p66 = scmp.eq.s32.totalorder %s25, 0
      %p67 = por %p65, %p66
      %p68 = scmp.ne.s32.totalorder %s56, %s57
      %p69 = scmp.eq.s32.totalorder %s26, 1
      %p70 = por %p68, %p69
      %p72 = scmp.ne.s32.totalorder %s57, %s71
      %p73 = scmp.eq.s32.totalorder %s26, 0
      %p74 = por %p72, %p73
      %s76 = sadd.s32 %s75, 1
      %p79 = scmp.eq.s32.totalorder %s20, 1
      %p80 = scmp.ne.s32.totalorder %s75, %s77
      %p81 = scmp.eq.s32.totalorder %s20, 0
      %p82 = por %p80, %p81
      %p83 = scmp.ne.s32.totalorder %s75, %s77
      %p84 = scmp.eq.s32.totalorder %s25, 1
      %p85 = por %p83, %p84
      %p86 = scmp.ne.s32.totalorder %s77, %s78
      %p87 = scmp.eq.s32.totalorder %s25, 0
      %p88 = por %p86, %p87
      %p89 = scmp.ne.s32.totalorder %s77, %s78
      %p90 = scmp.eq.s32.totalorder %s26, 1
      %p91 = por %p89, %p90
      %p93 = scmp.ne.s32.totalorder %s78, %s92
      %p94 = scmp.eq.s32.totalorder %s26, 0
      %p95 = por %p93, %p94
      %s97 = sadd.s32 %s96, 1
      %p100 = scmp.eq.s32.totalorder %s20, 1
      %p101 = scmp.ne.s32.totalorder %s96, %s98
      %p102 = scmp.eq.s32.totalorder %s20, 0
      %p103 = por %p101, %p102
      %p104 = scmp.ne.s32.totalorder %s96, %s98
      %p105 = scmp.eq.s32.totalorder %s25, 1
      %p106 = por %p104, %p105
      %p107 = scmp.ne.s32.totalorder %s98, %s99
      %p108 = scmp.eq.s32.totalorder %s25, 0
      %p109 = por %p107, %p108
      %p110 = scmp.ne.s32.totalorder %s98, %s99
      %p111 = scmp.eq.s32.totalorder %s26, 1
      %p112 = por %p110, %p111
      %p114 = scmp.ne.s32.totalorder %s99, %s113
      %p115 = scmp.eq.s32.totalorder %s26, 0
      %p116 = por %p114, %p115
      %s118 = sadd.s32 %s117, 1
      %p121 = scmp.eq.s32.totalorder %s20, 1
      %p122 = scmp.ne.s32.totalorder %s117, %s119
      %p123 = scmp.eq.s32.totalorder %s20, 0
      %p124 = por %p122, %p123
      %p125 = scmp.ne.s32.totalorder %s117, %s119
      %p126 = scmp.eq.s32.totalorder %s25, 1
      %p127 = por %p125, %p126
      %p128 = scmp.ne.s32.totalorder %s119, %s120
      %p129 = scmp.eq.s32.totalorder %s25, 0
      %p130 = por %p128, %p129
      %p131 = scmp.ne.s32.totalorder %s119, %s120
      %p132 = scmp.eq.s32.totalorder %s26, 1
      %p133 = por %p131, %p132
      %p135 = scmp.ne.s32.totalorder %s120, %s134
      %p136 = scmp.eq.s32.totalorder %s26, 0
      %p137 = por %p135, %p136
      %s139 = sadd.s32 %s138, 1
      %p142 = scmp.eq.s32.totalorder %s20, 1
      %p143 = scmp.ne.s32.totalorder %s138, %s140
      %p144 = scmp.eq.s32.totalorder %s20, 0
      %p145 = por %p143, %p144
      %p146 = scmp.ne.s32.totalorder %s138, %s140
      %p147 = scmp.eq.s32.totalorder %s25, 1
      %p148 = por %p146, %p147
      %p149 = scmp.ne.s32.totalorder %s140, %s141
      %p150 = scmp.eq.s32.totalorder %s25, 0
      %p151 = por %p149, %p150
      %p152 = scmp.ne.s32.totalorder %s140, %s141
      %p153 = scmp.eq.s32.totalorder %s26, 1
      %p154 = por %p152, %p153
      %p156 = scmp.ne.s32.totalorder %s141, %s155
      %p157 = scmp.eq.s32.totalorder %s26, 0
      %p158 = por %p156, %p157
      %s160 = sadd.s32 %s159, 1
      %p163 = scmp.eq.s32.totalorder %s20, 1
      %p164 = scmp.ne.s32.totalorder %s159, %s161
      %p165 = scmp.eq.s32.totalorder %s20, 0
      %p166 = por %p164, %p165
      %p167 = scmp.ne.s32.totalorder %s159, %s161
      %p168 = scmp.eq.s32.totalorder %s25, 1
      %p169 = por %p167, %p168
      %p170 = scmp.ne.s32.totalorder %s161, %s162
      %p171 = scmp.eq.s32.totalorder %s25, 0
      %p172 = por %p170, %p171
      %p173 = scmp.ne.s32.totalorder %s161, %s162
      %p174 = scmp.eq.s32.totalorder %s26, 1
      %p175 = por %p173, %p174
      %p177 = scmp.ne.s32.totalorder %s162, %s176
      %p178 = scmp.eq.s32.totalorder %s26, 0
      %p179 = por %p177, %p178
      %s180 = ssub.s32 %s20, %s27
      %p181 = scmp.eq.s32.totalorder %s180, 0
      %s183 = sadd.s32 %s182, 1
      %s184 = scalar_select %p181, %s182, %s183
      %p187 = pneg %p181
      %p188 = scmp.eq.s32.totalorder %s20, 1
      %p189 = por %p187, %p188
      %p190 = scmp.ne.s32.totalorder %s182, %s185
      %p191 = scmp.eq.s32.totalorder %s20, 0
      %p192 = por %p190, %p191
      %p193 = scmp.ne.s32.totalorder %s182, %s185
      %p194 = scmp.eq.s32.totalorder %s25, 1
      %p195 = por %p193, %p194
      %p196 = scmp.ne.s32.totalorder %s185, %s186
      %p197 = scmp.eq.s32.totalorder %s25, 0
      %p198 = por %p196, %p197
      %p199 = scmp.ne.s32.totalorder %s185, %s186
      %p200 = scmp.eq.s32.totalorder %s26, 1
      %p201 = por %p199, %p200
      %p203 = scmp.ne.s32.totalorder %s186, %s202
      %p204 = scmp.eq.s32.totalorder %s26, 0
      %p205 = por %p203, %p204
      %p206 = scmp.le.s32.totalorder 1, %s20
      %p207 = scmp.lt.s32.totalorder %s20, 3
      %p208 = pnand %p206, %p207
      %p209 = pneg %p208
      // Predicated region
      $region9: #{tpu_custom_call.1} parent=5 // pred_check
        _
      $region10: #{tpu_custom_call.1} parent=5 // pred_check_branch
        %211 = sbr.rel (%p208) target = $region12
      $region11: #{tpu_custom_call.1} parent=5 // pred_region
        %s212 = ssub.s32 %s20, 1
        // Predicated region
        $region13: #{tpu_custom_call.1} parent=11 // pred_check
          %p213 = pneg %p67
        $region14: #{tpu_custom_call.1} parent=11 // pred_check_branch
          %215 = sbr.rel (%p213) target = $region16
        $region15: #{tpu_custom_call.1} parent=11 // pred_region
          %s217 = ssub.s32 3072, 3072
          %218 = vsyncadd [#allocation7], %s217
          %s219 = sshll.u32 [#allocation6], 4
          %s220 = int_to_ptr.vmem [resolvable:$true] %s219
          %225 = dma.hbm_to_vmem [thread:$0]  %s1, 3072, %s220, [#allocation7], 64, 64, 4
        $region16: #{tpu_custom_call.1} parent=11 // pred_fallthru
          _
        // Predicated region
        $region17: #{tpu_custom_call.1} parent=11 // pred_check
          %p226 = pneg %p88
        $region18: #{tpu_custom_call.1} parent=11 // pred_check_branch
          %228 = sbr.rel (%p226) target = $region20
        $region19: #{tpu_custom_call.1} parent=11 // pred_region
          _
        $region20: #{tpu_custom_call.1} parent=11 // pred_fallthru
          _
        // Predicated region
        $region21: #{tpu_custom_call.1} parent=11 // pred_check
          %p229 = pneg %p109
        $region22: #{tpu_custom_call.1} parent=11 // pred_check_branch
          %231 = sbr.rel (%p229) target = $region24
        $region23: #{tpu_custom_call.1} parent=11 // pred_region
          _
        $region24: #{tpu_custom_call.1} parent=11 // pred_fallthru
          _
        // Predicated region
        $region25: #{tpu_custom_call.1} parent=11 // pred_check
          %p232 = pneg %p130
        $region26: #{tpu_custom_call.1} parent=11 // pred_check_branch
          %234 = sbr.rel (%p232) target = $region28
        $region27: #{tpu_custom_call.1} parent=11 // pred_region
          %s236 = ssub.s32 3072, 3072
          %237 = vsyncadd [#allocation7], %s236
          %s238 = sshll.u32 [#allocation8], 4
          %s239 = int_to_ptr.vmem [resolvable:$true] %s238
          %244 = dma.hbm_to_vmem [thread:$0]  %s4, 3072, %s239, [#allocation7], 64, 64, 4
        $region28: #{tpu_custom_call.1} parent=11 // pred_fallthru
          _
        // Predicated region
        $region29: #{tpu_custom_call.1} parent=11 // pred_check
          %p245 = pneg %p151
        $region30: #{tpu_custom_call.1} parent=11 // pred_check_branch
          %247 = sbr.rel (%p245) target = $region32
        $region31: #{tpu_custom_call.1} parent=11 // pred_region
          _
        $region32: #{tpu_custom_call.1} parent=11 // pred_fallthru
          _
        // Predicated region
        $region33: #{tpu_custom_call.1} parent=11 // pred_check
          %p248 = pneg %p172
        $region34: #{tpu_custom_call.1} parent=11 // pred_check_branch
          %250 = sbr.rel (%p248) target = $region36
        $region35: #{tpu_custom_call.1} parent=11 // pred_region
          _
        $region36: #{tpu_custom_call.1} parent=11 // pred_fallthru
          _
      $region12: #{tpu_custom_call.1} parent=5 // pred_fallthru
        _
      %p251 = scmp.lt.s32.totalorder %s20, 2
      // Predicated region
      $region37: #{tpu_custom_call.1} parent=5 // pred_check
        %p252 = pneg %p251
      $region38: #{tpu_custom_call.1} parent=5 // pred_check_branch
        %254 = sbr.rel (%p252) target = $region40
      $region39: #{tpu_custom_call.1} parent=5 // pred_region
        // Predicated region
        $region41: #{tpu_custom_call.1} parent=39 // pred_check
          %p255 = pneg %p40
        $region42: #{tpu_custom_call.1} parent=39 // pred_check_branch
          %257 = sbr.rel (%p255) target = $region44
        $region43: #{tpu_custom_call.1} parent=39 // pred_region
          %s258 = sand.u32 %s30, 1
          %s259 = scalar_lea.sflag [#allocation4], %s258
          %s260 = sand.u32 %s30, 1
          %s261 = smul.addr %s260, 128
          %s262 = scalar_lea.vmem [#allocation3], %s261
          %s263 = smul.u32 8, %s20
          %s265 = ssub.s32 2048, 2048
          %266 = vsyncadd %s259, %s265
          %s267 = smul.addr %s263, 2
          %s268 = smul.addr %s267, 128
          %s269 = scalar_lea.hbm %s0, %s268
          %s270 = sshll.u32 %s262, 4
          %s271 = int_to_ptr.vmem [resolvable:$true] %s270
          %276 = dma.hbm_to_vmem [thread:$0]  %s269, 2048, %s271, %s259, 128, 128, 8
        $region44: #{tpu_custom_call.1} parent=39 // pred_fallthru
          _
      $region40: #{tpu_custom_call.1} parent=5 // pred_fallthru
        _
      %p277 = scmp.le.s32.totalorder 1, %s20
      %p278 = scmp.lt.s32.totalorder %s20, 3
      %p279 = pnand %p277, %p278
      %p280 = pneg %p279
      // Predicated region
      $region45: #{tpu_custom_call.1} parent=5 // pred_check
        _
      $region46: #{tpu_custom_call.1} parent=5 // pred_check_branch
        %282 = sbr.rel (%p279) target = $region48
      $region47: #{tpu_custom_call.1} parent=5 // pred_region
        %s283 = ssub.s32 %s20, 1
        %s284 = sand.u32 %s33, 1
        %s285 = scalar_lea.sflag [#allocation4], %s284
        %s286 = sand.u32 %s33, 1
        %s287 = smul.addr %s286, 128
        %s288 = scalar_lea.vmem [#allocation3], %s287
        // Predicated region
        $region49: #{tpu_custom_call.1} parent=47 // pred_check
          %p289 = pneg %p46
        $region50: #{tpu_custom_call.1} parent=47 // pred_check_branch
          %291 = sbr.rel (%p289) target = $region52
        $region51: #{tpu_custom_call.1} parent=47 // pred_region
          %292 = dma.done %s285, 2048
        $region52: #{tpu_custom_call.1} parent=47 // pred_fallthru
          _
        // Predicated region
        $region53: #{tpu_custom_call.1} parent=47 // pred_check
          %p293 = pneg %p67
        $region54: #{tpu_custom_call.1} parent=47 // pred_check_branch
          %295 = sbr.rel (%p293) target = $region56
        $region55: #{tpu_custom_call.1} parent=47 // pred_region
          %296 = dma.done [#allocation7], 3072
        $region56: #{tpu_custom_call.1} parent=47 // pred_fallthru
          _
        // Predicated region
        $region57: #{tpu_custom_call.1} parent=47 // pred_check
          %p297 = pneg %p130
        $region58: #{tpu_custom_call.1} parent=47 // pred_check_branch
          %299 = sbr.rel (%p297) target = $region60
        $region59: #{tpu_custom_call.1} parent=47 // pred_region
          %300 = dma.done [#allocation7], 3072
        $region60: #{tpu_custom_call.1} parent=47 // pred_fallthru
          _
        %s301 = sand.u32 %s33, 1
        %s302 = scalar_lea.sflag [#allocation4], %s301
        %s303 = sand.u32 %s33, 1
        %s304 = smul.addr %s303, 128
        %s305 = scalar_lea.vmem [#allocation3], %s304
        %p306 = pneg %p46
        %p307 = pneg %p43
        %p308 = pneg %p67
        %p309 = pneg %p64
        %p310 = pneg %p88
        %p311 = pneg %p85
        %p312 = pneg %p109
        %p313 = pneg %p106
        %p314 = pneg %p130
        %p315 = pneg %p127
        %p316 = pneg %p151
        %p317 = pneg %p148
        %p318 = pneg %p172
        %p319 = pneg %p169
        %p320 = pneg %p198
        %p321 = pneg %p195
        %s322 = sand.u32 %s185, 1
        %s323 = scalar_lea.sflag [#allocation5], %s322
        %s324 = sand.u32 %s185, 1
        %s325 = smul.addr %s324, 128
        %s326 = scalar_lea.vmem [#allocation9], %s325
        %s327 = smul.u32 8, %s25
        %s328 = smul.u32 8, %s25
        %v330 = vlaneseq
        %v331 = vshrl.u32 %v330, 7
        %v332 = vadd.s32 %v331, 8
        %vm333 = vcmp.ge.s32.totalorder %v331, 1
        %vm334 = vcmp.ge.s32.totalorder %v332, 1
        %vm335 = vcmp.le.s32.totalorder %v331, 14
        %vm336 = vcmp.le.s32.totalorder %v332, 14
        %v337 = vld [vmem:[%s288] sm:$0xff]
        %v338 = vld [vmem:[%s288 + $0x8] sm:$0xff]
        %v339 = vrot.slane %v337, 7
        %v340 = vrot.slane %v338, 7
        %vm341 = vcmp.lt.s32.totalorder %v331, 1
        %v342 = vsel %vm341, %v339, %v340
        %v343 = vsel %vm341, %v340, %v339
        %v344 = vsel %vm333, %v343, 0.0
        %v345 = vsel %vm334, %v342, 0.0
        %v346 = vpack.c.bf16 %v345, %v344
        %347 = vst [vmem:[#allocation2] sm:$0xff] %v346
        %v348 = vpack.c.bf16 %v338, %v337
        %349 = vst [vmem:[#allocation2 + $0x8] sm:$0xff] %v348
        %v350 = vrot.slane %v337, 1
        %v351 = vrot.slane %v338, 1
        %vm352 = vcmp.lt.s32.totalorder %v331, 7
        %v353 = vsel %vm352, %v350, %v351
        %v354 = vsel %vm352, %v351, %v350
        %v355 = vsel %vm335, %v353, 0.0
        %v356 = vsel %vm336, %v354, 0.0
        %v357 = vpack.c.bf16 %v356, %v355
        %358 = vst [vmem:[#allocation2 + $0x10] sm:$0xff] %v357
        %s359 = scalar_lea.vmem %s288, 16 [#allocation3]
        %v360 = vld [vmem:[%s359] sm:$0xff]
        %v361 = vld [vmem:[%s359 + $0x8] sm:$0xff]
        %v362 = vrot.slane %v360, 7
        %v363 = vrot.slane %v361, 7
        %v364 = vsel %vm341, %v362, %v363
        %v365 = vsel %vm341, %v363, %v362
        %v366 = vsel %vm333, %v365, 0.0
        %v367 = vsel %vm334, %v364, 0.0
        %v368 = vpack.c.bf16 %v367, %v366
        %369 = vst [vmem:[#allocation2 + $0x18] sm:$0xff] %v368
        %v370 = vpack.c.bf16 %v361, %v360
        %371 = vst [vmem:[#allocation2 + $0x20] sm:$0xff] %v370
        %v372 = vrot.slane %v360, 1
        %v373 = vrot.slane %v361, 1
        %v374 = vsel %vm352, %v372, %v373
        %v375 = vsel %vm352, %v373, %v372
        %v376 = vsel %vm335, %v374, 0.0
        %v377 = vsel %vm336, %v375, 0.0
        %v378 = vpack.c.bf16 %v377, %v376
        %379 = vst [vmem:[#allocation2 + $0x28] sm:$0xff] %v378
        %s380 = scalar_lea.vmem %s288, 32 [#allocation3]
        %v381 = vld [vmem:[%s380] sm:$0xff]
        %v382 = vld [vmem:[%s380 + $0x8] sm:$0xff]
        %v383 = vrot.slane %v381, 7
        %v384 = vrot.slane %v382, 7
        %v385 = vsel %vm341, %v383, %v384
        %v386 = vsel %vm341, %v384, %v383
        %v387 = vsel %vm333, %v386, 0.0
        %v388 = vsel %vm334, %v385, 0.0
        %v389 = vpack.c.bf16 %v388, %v387
        %390 = vst [vmem:[#allocation2 + $0x30] sm:$0xff] %v389
        %v391 = vpack.c.bf16 %v382, %v381
        %392 = vst [vmem:[#allocation2 + $0x38] sm:$0xff] %v391
        %v393 = vrot.slane %v381, 1
        %v394 = vrot.slane %v382, 1
        %v395 = vsel %vm352, %v393, %v394
        %v396 = vsel %vm352, %v394, %v393
        %v397 = vsel %vm335, %v395, 0.0
        %v398 = vsel %vm336, %v396, 0.0
        %v399 = vpack.c.bf16 %v398, %v397
        %400 = vst [vmem:[#allocation2 + $0x40] sm:$0xff] %v399
        %s401 = scalar_lea.vmem %s288, 48 [#allocation3]
        %v402 = vld [vmem:[%s401] sm:$0xff]
        %v403 = vld [vmem:[%s401 + $0x8] sm:$0xff]
        %v404 = vrot.slane %v402, 7
        %v405 = vrot.slane %v403, 7
        %v406 = vsel %vm341, %v404, %v405
        %v407 = vsel %vm341, %v405, %v404
        %v408 = vsel %vm333, %v407, 0.0
        %v409 = vsel %vm334, %v406, 0.0
        %v410 = vpack.c.bf16 %v409, %v408
        %411 = vst [vmem:[#allocation2 + $0x48] sm:$0xff] %v410
        %v412 = vpack.c.bf16 %v403, %v402
        %413 = vst [vmem:[#allocation2 + $0x50] sm:$0xff] %v412
        %v414 = vrot.slane %v402, 1
        %v415 = vrot.slane %v403, 1
        %v416 = vsel %vm352, %v414, %v415
        %v417 = vsel %vm352, %v415, %v414
        %v418 = vsel %vm335, %v416, 0.0
        %v419 = vsel %vm336, %v417, 0.0
        %v420 = vpack.c.bf16 %v419, %v418
        %421 = vst [vmem:[#allocation2 + $0x58] sm:$0xff] %v420
        %s422 = scalar_lea.vmem %s288, 64 [#allocation3]
        %v423 = vld [vmem:[%s422] sm:$0xff]
        %v424 = vld [vmem:[%s422 + $0x8] sm:$0xff]
        %v425 = vrot.slane %v423, 7
        %v426 = vrot.slane %v424, 7
        %v427 = vsel %vm341, %v425, %v426
        %v428 = vsel %vm341, %v426, %v425
        %v429 = vsel %vm333, %v428, 0.0
        %v430 = vsel %vm334, %v427, 0.0
        %v431 = vpack.c.bf16 %v430, %v429
        %432 = vst [vmem:[#allocation2 + $0x60] sm:$0xff] %v431
        %v433 = vpack.c.bf16 %v424, %v423
        %434 = vst [vmem:[#allocation2 + $0x68] sm:$0xff] %v433
        %v435 = vrot.slane %v423, 1
        %v436 = vrot.slane %v424, 1
        %v437 = vsel %vm352, %v435, %v436
        %v438 = vsel %vm352, %v436, %v435
        %v439 = vsel %vm335, %v437, 0.0
        %v440 = vsel %vm336, %v438, 0.0
        %v441 = vpack.c.bf16 %v440, %v439
        %442 = vst [vmem:[#allocation2 + $0x70] sm:$0xff] %v441
        %s443 = scalar_lea.vmem %s288, 80 [#allocation3]
        %v444 = vld [vmem:[%s443] sm:$0xff]
        %v445 = vld [vmem:[%s443 + $0x8] sm:$0xff]
        %v446 = vrot.slane %v444, 7
        %v447 = vrot.slane %v445, 7
        %v448 = vsel %vm341, %v446, %v447
        %v449 = vsel %vm341, %v447, %v446
        %v450 = vsel %vm333, %v449, 0.0
        %v451 = vsel %vm334, %v448, 0.0
        %v452 = vpack.c.bf16 %v451, %v450
        %453 = vst [vmem:[#allocation2 + $0x78] sm:$0xff] %v452
        %v454 = vpack.c.bf16 %v445, %v444
        %455 = vst [vmem:[#allocation2 + $0x80] sm:$0xff] %v454
        %v456 = vrot.slane %v444, 1
        %v457 = vrot.slane %v445, 1
        %v458 = vsel %vm352, %v456, %v457
        %v459 = vsel %vm352, %v457, %v456
        %v460 = vsel %vm335, %v458, 0.0
        %v461 = vsel %vm336, %v459, 0.0
        %v462 = vpack.c.bf16 %v461, %v460
        %463 = vst [vmem:[#allocation2 + $0x88] sm:$0xff] %v462
        %s464 = scalar_lea.vmem %s288, 96 [#allocation3]
        %v465 = vld [vmem:[%s464] sm:$0xff]
        %v466 = vld [vmem:[%s464 + $0x8] sm:$0xff]
        %v467 = vrot.slane %v465, 7
        %v468 = vrot.slane %v466, 7
        %v469 = vsel %vm341, %v467, %v468
        %v470 = vsel %vm341, %v468, %v467
        %v471 = vsel %vm333, %v470, 0.0
        %v472 = vsel %vm334, %v469, 0.0
        %v473 = vpack.c.bf16 %v472, %v471
        %474 = vst [vmem:[#allocation2 + $0x90] sm:$0xff] %v473
        %v475 = vpack.c.bf16 %v466, %v465
        %476 = vst [vmem:[#allocation2 + $0x98] sm:$0xff] %v475
        %v477 = vrot.slane %v465, 1
        %v478 = vrot.slane %v466, 1
        %v479 = vsel %vm352, %v477, %v478
        %v480 = vsel %vm352, %v478, %v477
        %v481 = vsel %vm335, %v479, 0.0
        %v482 = vsel %vm336, %v480, 0.0
        %v483 = vpack.c.bf16 %v482, %v481
        %484 = vst [vmem:[#allocation2 + $0xa0] sm:$0xff] %v483
        %s485 = scalar_lea.vmem %s288, 112 [#allocation3]
        %v486 = vld [vmem:[%s485] sm:$0xff]
        %v487 = vld [vmem:[%s485 + $0x8] sm:$0xff]
        %v488 = vrot.slane %v486, 7
        %v489 = vrot.slane %v487, 7
        %v490 = vsel %vm341, %v488, %v489
        %v491 = vsel %vm341, %v489, %v488
        %v492 = vsel %vm333, %v491, 0.0
        %v493 = vsel %vm334, %v490, 0.0
        %v494 = vpack.c.bf16 %v493, %v492
        %495 = vst [vmem:[#allocation2 + $0xa8] sm:$0xff] %v494
        %v496 = vpack.c.bf16 %v487, %v486
        %497 = vst [vmem:[#allocation2 + $0xb0] sm:$0xff] %v496
        %v498 = vrot.slane %v486, 1
        %v499 = vrot.slane %v487, 1
        %v500 = vsel %vm352, %v498, %v499
        %v501 = vsel %vm352, %v499, %v498
        %v502 = vsel %vm335, %v500, 0.0
        %v503 = vsel %vm336, %v501, 0.0
        %v504 = vpack.c.bf16 %v503, %v502
        %505 = vst [vmem:[#allocation2 + $0xb8] sm:$0xff] %v504
        %v506 = vld [vmem:[#allocation2] sm:$0xff]
        %v507 = vld [vmem:[#allocation2 + $0x8] sm:$0xff]
        %v508 = vld [vmem:[#allocation2 + $0x10] sm:$0xff]
        %v509 = vld [vmem:[#allocation2 + $0x18] sm:$0xff]
        %v510 = vld [vmem:[#allocation2 + $0x20] sm:$0xff]
        %v511 = vld [vmem:[#allocation2 + $0x28] sm:$0xff]
        %v512 = vld [vmem:[#allocation2 + $0x30] sm:$0xff]
        %v513 = vld [vmem:[#allocation2 + $0x38] sm:$0xff]
        %v514 = vld [vmem:[#allocation2 + $0x40] sm:$0xff]
        %v515 = vld [vmem:[#allocation2 + $0x48] sm:$0xff]
        %v516 = vld [vmem:[#allocation2 + $0x50] sm:$0xff]
        %v517 = vld [vmem:[#allocation2 + $0x58] sm:$0xff]
        %v518 = vld [vmem:[#allocation2 + $0x60] sm:$0xff]
        %v519 = vld [vmem:[#allocation2 + $0x68] sm:$0xff]
        %v520 = vld [vmem:[#allocation2 + $0x70] sm:$0xff]
        %v521 = vld [vmem:[#allocation2 + $0x78] sm:$0xff]
        %v522 = vld [vmem:[#allocation2 + $0x80] sm:$0xff]
        %v523 = vld [vmem:[#allocation2 + $0x88] sm:$0xff]
        %v524 = vld [vmem:[#allocation2 + $0x90] sm:$0xff]
        %v525 = vld [vmem:[#allocation2 + $0x98] sm:$0xff]
        %v526 = vld [vmem:[#allocation2 + $0xa0] sm:$0xff]
        %v527 = vld [vmem:[#allocation2 + $0xa8] sm:$0xff]
        %v528 = vld [vmem:[#allocation2 + $0xb0] sm:$0xff]
        %v529 = vld [vmem:[#allocation2 + $0xb8] sm:$0xff]
        %v530 = vld [vmem:[#allocation6] sm:$0xf]
        %v531 = vld [vmem:[#allocation6 + $0x4] sm:$0xf]
        %v532 = vld [vmem:[#allocation6 + $0x8] sm:$0xf]
        %v533 = vld [vmem:[#allocation6 + $0xc] sm:$0xf]
        %v534 = vld [vmem:[#allocation6 + $0x10] sm:$0xf]
        %v535 = vld [vmem:[#allocation6 + $0x14] sm:$0xf]
        %v536 = vld [vmem:[#allocation6 + $0x18] sm:$0xf]
        %v537 = vld [vmem:[#allocation6 + $0x1c] sm:$0xf]
        %v538 = vld [vmem:[#allocation6 + $0x20] sm:$0xf]
        %v539 = vld [vmem:[#allocation6 + $0x24] sm:$0xf]
        %v540 = vld [vmem:[#allocation6 + $0x28] sm:$0xf]
        %v541 = vld [vmem:[#allocation6 + $0x2c] sm:$0xf]
        %v542 = vld [vmem:[#allocation6 + $0x30] sm:$0xf]
        %v543 = vld [vmem:[#allocation6 + $0x34] sm:$0xf]
        %v544 = vld [vmem:[#allocation6 + $0x38] sm:$0xf]
        %v545 = vld [vmem:[#allocation6 + $0x3c] sm:$0xf]
        %v546 = vld [vmem:[#allocation6 + $0x40] sm:$0xf]
        %v547 = vld [vmem:[#allocation6 + $0x44] sm:$0xf]
        %v548 = vld [vmem:[#allocation6 + $0x48] sm:$0xf]
        %v549 = vld [vmem:[#allocation6 + $0x4c] sm:$0xf]
        %v550 = vld [vmem:[#allocation6 + $0x50] sm:$0xf]
        %v551 = vld [vmem:[#allocation6 + $0x54] sm:$0xf]
        %v552 = vld [vmem:[#allocation6 + $0x58] sm:$0xf]
        %v553 = vld [vmem:[#allocation6 + $0x5c] sm:$0xf]
        %v554 = vld [vmem:[#allocation6 + $0x60] sm:$0xf]
        %v555 = vld [vmem:[#allocation6 + $0x64] sm:$0xf]
        %v556 = vld [vmem:[#allocation6 + $0x68] sm:$0xf]
        %v557 = vld [vmem:[#allocation6 + $0x6c] sm:$0xf]
        %v558 = vld [vmem:[#allocation6 + $0x70] sm:$0xf]
        %v559 = vld [vmem:[#allocation6 + $0x74] sm:$0xf]
        %v560 = vld [vmem:[#allocation6 + $0x78] sm:$0xf]
        %v561 = vld [vmem:[#allocation6 + $0x7c] sm:$0xf]
        %v562 = vld [vmem:[#allocation6 + $0x80] sm:$0xf]
        %v563 = vld [vmem:[#allocation6 + $0x84] sm:$0xf]
        %v564 = vld [vmem:[#allocation6 + $0x88] sm:$0xf]
        %v565 = vld [vmem:[#allocation6 + $0x8c] sm:$0xf]
        %v566 = vld [vmem:[#allocation6 + $0x90] sm:$0xf]
        %v567 = vld [vmem:[#allocation6 + $0x94] sm:$0xf]
        %v568 = vld [vmem:[#allocation6 + $0x98] sm:$0xf]
        %v569 = vld [vmem:[#allocation6 + $0x9c] sm:$0xf]
        %v570 = vld [vmem:[#allocation6 + $0xa0] sm:$0xf]
        %v571 = vld [vmem:[#allocation6 + $0xa4] sm:$0xf]
        %v572 = vld [vmem:[#allocation6 + $0xa8] sm:$0xf]
        %v573 = vld [vmem:[#allocation6 + $0xac] sm:$0xf]
        %v574 = vld [vmem:[#allocation6 + $0xb0] sm:$0xf]
        %v575 = vld [vmem:[#allocation6 + $0xb4] sm:$0xf]
        %v576 = vld [vmem:[#allocation6 + $0xb8] sm:$0xf]
        %v577 = vld [vmem:[#allocation6 + $0xbc] sm:$0xf]
        %v626 = vunpack.c.l.b16 %v530
        %v627 = vunpack.c.l.b16 %v531
        %v628 = vunpack.c.l.b16 %v532
        %v629 = vunpack.c.l.b16 %v533
        %v630 = vunpack.c.l.b16 %v534
        %v631 = vunpack.c.l.b16 %v535
        %v632 = vunpack.c.l.b16 %v536
        %v633 = vunpack.c.l.b16 %v537
        %v634 = vunpack.c.l.b16 %v538
        %v635 = vunpack.c.l.b16 %v539
        %v636 = vunpack.c.l.b16 %v540
        %v637 = vunpack.c.l.b16 %v541
        %v638 = vunpack.c.l.b16 %v542
        %v639 = vunpack.c.l.b16 %v543
        %v640 = vunpack.c.l.b16 %v544
        %v641 = vunpack.c.l.b16 %v545
        %v642 = vunpack.c.l.b16 %v546
        %v643 = vunpack.c.l.b16 %v547
        %v644 = vunpack.c.l.b16 %v548
        %v645 = vunpack.c.l.b16 %v549
        %v646 = vunpack.c.l.b16 %v550
        %v647 = vunpack.c.l.b16 %v551
        %v648 = vunpack.c.l.b16 %v552
        %v649 = vunpack.c.l.b16 %v553
        %v650 = vunpack.c.l.b16 %v554
        %v651 = vunpack.c.l.b16 %v555
        %v652 = vunpack.c.l.b16 %v556
        %v653 = vunpack.c.l.b16 %v557
        %v654 = vunpack.c.l.b16 %v558
        %v655 = vunpack.c.l.b16 %v559
        %v656 = vunpack.c.l.b16 %v560
        %v657 = vunpack.c.l.b16 %v561
        %v658 = vunpack.c.l.b16 %v562
        %v659 = vunpack.c.l.b16 %v563
        %v660 = vunpack.c.l.b16 %v564
        %v661 = vunpack.c.l.b16 %v565
        %v662 = vunpack.c.l.b16 %v566
        %v663 = vunpack.c.l.b16 %v567
        %v664 = vunpack.c.l.b16 %v568
        %v665 = vunpack.c.l.b16 %v569
        %v666 = vunpack.c.l.b16 %v570
        %v667 = vunpack.c.l.b16 %v571
        %v668 = vunpack.c.l.b16 %v572
        %v669 = vunpack.c.l.b16 %v573
        %v670 = vunpack.c.l.b16 %v574
        %v671 = vunpack.c.l.b16 %v575
        %v672 = vunpack.c.l.b16 %v576
        %v673 = vunpack.c.l.b16 %v577
        %v674 = vpack.c.b16 %v627, %v626
        %v675 = vpack.c.b16 %v629, %v628
        %v676 = vpack.c.b16 %v631, %v630
        %v677 = vpack.c.b16 %v633, %v632
        %v678 = vpack.c.b16 %v635, %v634
        %v679 = vpack.c.b16 %v637, %v636
        %v680 = vpack.c.b16 %v639, %v638
        %v681 = vpack.c.b16 %v641, %v640
        %v682 = vpack.c.b16 %v643, %v642
        %v683 = vpack.c.b16 %v645, %v644
        %v684 = vpack.c.b16 %v647, %v646
        %v685 = vpack.c.b16 %v649, %v648
        %v686 = vpack.c.b16 %v651, %v650
        %v687 = vpack.c.b16 %v653, %v652
        %v688 = vpack.c.b16 %v655, %v654
        %v689 = vpack.c.b16 %v657, %v656
        %v690 = vpack.c.b16 %v659, %v658
        %v691 = vpack.c.b16 %v661, %v660
        %v692 = vpack.c.b16 %v663, %v662
        %v693 = vpack.c.b16 %v665, %v664
        %v694 = vpack.c.b16 %v667, %v666
        %v695 = vpack.c.b16 %v669, %v668
        %v696 = vpack.c.b16 %v671, %v670
        %v697 = vpack.c.b16 %v673, %v672
        %722 = vmatprep.subr.bf16.mxu0 0
        %723 = vmatpush1.bf16.msra.mxu0 %v674
        %724 = vmatprep.subr.bf16.mxu0 0
        %725 = vmatpush1.bf16.msra.mxu0 %v675
        %726 = vmatprep.subr.bf16.mxu0 0
        %727 = vmatpush1.bf16.msra.mxu0 %v676
        %728 = vmatprep.subr.bf16.mxu0 0
        %729 = vmatpush1.bf16.msra.mxu0 %v677
        %730 = vmatprep.subr.bf16.mxu0 0
        %731 = vmatpush1.bf16.msra.mxu0 %v678
        %732 = vmatprep.subr.bf16.mxu0 0
        %733 = vmatpush1.bf16.msra.mxu0 %v679
        %734 = vmatprep.subr.bf16.mxu0 0
        %735 = vmatpush1.bf16.msra.mxu0 %v680
        %736 = vmatprep.subr.bf16.mxu0 0
        %737 = vmatpush1.bf16.msra.mxu0 %v681
        %738 = vmatprep.subr.bf16.mxu0 0
        %739 = vmatpush1.bf16.msra.mxu0 %v682
        %740 = vmatprep.subr.bf16.mxu0 0
        %741 = vmatpush1.bf16.msra.mxu0 %v683
        %742 = vmatprep.subr.bf16.mxu0 0
        %743 = vmatpush1.bf16.msra.mxu0 %v684
        %744 = vmatprep.subr.bf16.mxu0 0
        %745 = vmatpush1.bf16.msra.mxu0 %v685
        %746 = vmatprep.subr.bf16.mxu0 0
        %747 = vmatpush1.bf16.msra.mxu0 %v686
        %748 = vmatprep.subr.bf16.mxu0 0
        %749 = vmatpush1.bf16.msra.mxu0 %v687
        %750 = vmatprep.subr.bf16.mxu0 0
        %751 = vmatpush1.bf16.msra.mxu0 %v688
        %752 = vmatprep.subr.bf16.mxu0 0
        %753 = vmatpush1.bf16.msra.mxu0 %v689
        %754 = vmatprep.mubr.bf16.mxu0 %v507
        %755 = vmatmul.mubr.bf16.gmra.mrb[0].mxu0 %v506
        %v756 = vpop.f32.mrb[0].mxu0
        %v757 = vadd.f32 0.0, %v756
        %v758 = vpop.f32.mrb[0].mxu0
        %v759 = vpop.f32.mrb[0].mxu0
        %v760 = vadd.f32 0.0, %v759
        %v761 = vpop.f32.mrb[0].mxu0
        %762 = vmatprep.mubr.bf16.mxu0 %v510
        %763 = vmatmul.mubr.bf16.gmra.mrb[0].mxu0 %v509
        %v764 = vpop.f32.mrb[0].mxu0
        %v765 = vadd.f32 0.0, %v764
        %v766 = vpop.f32.mrb[0].mxu0
        %v767 = vpop.f32.mrb[0].mxu0
        %v768 = vadd.f32 0.0, %v767
        %v769 = vpop.f32.mrb[0].mxu0
        %770 = vmatprep.mubr.bf16.mxu0 %v513
        %771 = vmatmul.mubr.bf16.gmra.mrb[0].mxu0 %v512
        %v772 = vpop.f32.mrb[0].mxu0
        %v773 = vadd.f32 0.0, %v772
        %v774 = vpop.f32.mrb[0].mxu0
        %v775 = vpop.f32.mrb[0].mxu0
        %v776 = vadd.f32 0.0, %v775
        %v777 = vpop.f32.mrb[0].mxu0
        %778 = vmatprep.mubr.bf16.mxu0 %v516
        %779 = vmatmul.mubr.bf16.gmra.mrb[0].mxu0 %v515
        %v780 = vpop.f32.mrb[0].mxu0
        %v781 = vadd.f32 0.0, %v780
        %v782 = vpop.f32.mrb[0].mxu0
        %v783 = vpop.f32.mrb[0].mxu0
        %v784 = vadd.f32 0.0, %v783
        %v785 = vpop.f32.mrb[0].mxu0
        %786 = vmatprep.mubr.bf16.mxu0 %v519
        %787 = vmatmul.mubr.bf16.gmra.mrb[0].mxu0 %v518
        %v788 = vpop.f32.mrb[0].mxu0
        %v789 = vadd.f32 0.0, %v788
        %v790 = vpop.f32.mrb[0].mxu0
        %v791 = vpop.f32.mrb[0].mxu0
        %v792 = vadd.f32 0.0, %v791
        %v793 = vpop.f32.mrb[0].mxu0
        %794 = vmatprep.mubr.bf16.mxu0 %v522
        %795 = vmatmul.mubr.bf16.gmra.mrb[0].mxu0 %v521
        %v796 = vpop.f32.mrb[0].mxu0
        %v797 = vadd.f32 0.0, %v796
        %v798 = vpop.f32.mrb[0].mxu0
        %v799 = vpop.f32.mrb[0].mxu0
        %v800 = vadd.f32 0.0, %v799
        %v801 = vpop.f32.mrb[0].mxu0
        %802 = vmatprep.mubr.bf16.mxu0 %v525
        %803 = vmatmul.mubr.bf16.gmra.mrb[0].mxu0 %v524
        %v804 = vpop.f32.mrb[0].mxu0
        %v805 = vadd.f32 0.0, %v804
        %v806 = vpop.f32.mrb[0].mxu0
        %v807 = vpop.f32.mrb[0].mxu0
        %v808 = vadd.f32 0.0, %v807
        %v809 = vpop.f32.mrb[0].mxu0
        %810 = vmatprep.mubr.bf16.mxu0 %v528
        %811 = vmatmul.mubr.bf16.gmra.mrb[0].mxu0 %v527
        %v812 = vpop.f32.mrb[0].mxu0
        %v813 = vadd.f32 0.0, %v812
        %v814 = vpop.f32.mrb[0].mxu0
        %v815 = vpop.f32.mrb[0].mxu0
        %v816 = vadd.f32 0.0, %v815
        %v817 = vpop.f32.mrb[0].mxu0
        %818 = vdwg.mxu0
        %819 = vmatprep.subr.bf16.mxu0 0
        %820 = vmatpush1.bf16.msra.mxu0 %v690
        %821 = vmatprep.subr.bf16.mxu0 0
        %822 = vmatpush1.bf16.msra.mxu0 %v691
        %823 = vmatprep.subr.bf16.mxu0 0
        %824 = vmatpush1.bf16.msra.mxu0 %v692
        %825 = vmatprep.subr.bf16.mxu0 0
        %826 = vmatpush1.bf16.msra.mxu0 %v693
        %827 = vmatprep.subr.bf16.mxu0 0
        %828 = vmatpush1.bf16.msra.mxu0 %v694
        %829 = vmatprep.subr.bf16.mxu0 0
        %830 = vmatpush1.bf16.msra.mxu0 %v695
        %831 = vmatprep.subr.bf16.mxu0 0
        %832 = vmatpush1.bf16.msra.mxu0 %v696
        %833 = vmatprep.subr.bf16.mxu0 0
        %834 = vmatpush1.bf16.msra.mxu0 %v697
        %835 = vmatprep.subr.bf16.mxu0 0
        %836 = vmatpush1.bf16.msra.mxu0 0
        %837 = vmatprep.subr.bf16.mxu0 0
        %838 = vmatpush1.bf16.msra.mxu0 0
        %839 = vmatprep.subr.bf16.mxu0 0
        %840 = vmatpush1.bf16.msra.mxu0 0
        %841 = vmatprep.subr.bf16.mxu0 0
        %842 = vmatpush1.bf16.msra.mxu0 0
        %843 = vmatprep.subr.bf16.mxu0 0
        %844 = vmatpush1.bf16.msra.mxu0 0
        %845 = vmatprep.subr.bf16.mxu0 0
        %846 = vmatpush1.bf16.msra.mxu0 0
        %847 = vmatprep.subr.bf16.mxu0 0
        %848 = vmatpush1.bf16.msra.mxu0 0
        %849 = vmatprep.subr.bf16.mxu0 0
        %850 = vmatpush1.bf16.msra.mxu0 0
        %851 = vmatprep.mubr.bf16.mxu0 0
        %852 = vmatmul.mubr.bf16.gmra.mrb[0].mxu0 %v508
        %v853 = vpop.f32.mrb[0].mxu0
        %v854 = vadd.f32 %v757, %v853
        %v855 = vpop.f32.mrb[0].mxu0
        %v856 = vpop.f32.mrb[0].mxu0
        %v857 = vadd.f32 %v760, %v856
        %v858 = vpop.f32.mrb[0].mxu0
        %859 = vmatprep.mubr.bf16.mxu0 0
        %860 = vmatmul.mubr.bf16.gmra.mrb[0].mxu0 %v511
        %v861 = vpop.f32.mrb[0].mxu0
        %v862 = vadd.f32 %v765, %v861
        %v863 = vpop.f32.mrb[0].mxu0
        %v864 = vpop.f32.mrb[0].mxu0
        %v865 = vadd.f32 %v768, %v864
        %v866 = vpop.f32.mrb[0].mxu0
        %867 = vmatprep.mubr.bf16.mxu0 0
        %868 = vmatmul.mubr.bf16.gmra.mrb[0].mxu0 %v514
        %v869 = vpop.f32.mrb[0].mxu0
        %v870 = vadd.f32 %v773, %v869
        %v871 = vpop.f32.mrb[0].mxu0
        %v872 = vpop.f32.mrb[0].mxu0
        %v873 = vadd.f32 %v776, %v872
        %v874 = vpop.f32.mrb[0].mxu0
        %875 = vmatprep.mubr.bf16.mxu0 0
        %876 = vmatmul.mubr.bf16.gmra.mrb[0].mxu0 %v517
        %v877 = vpop.f32.mrb[0].mxu0
        %v878 = vadd.f32 %v781, %v877
        %v879 = vpop.f32.mrb[0].mxu0
        %v880 = vpop.f32.mrb[0].mxu0
        %v881 = vadd.f32 %v784, %v880
        %v882 = vpop.f32.mrb[0].mxu0
        %883 = vmatprep.mubr.bf16.mxu0 0
        %884 = vmatmul.mubr.bf16.gmra.mrb[0].mxu0 %v520
        %v885 = vpop.f32.mrb[0].mxu0
        %v886 = vadd.f32 %v789, %v885
        %v887 = vpop.f32.mrb[0].mxu0
        %v888 = vpop.f32.mrb[0].mxu0
        %v889 = vadd.f32 %v792, %v888
        %v890 = vpop.f32.mrb[0].mxu0
        %891 = vmatprep.mubr.bf16.mxu0 0
        %892 = vmatmul.mubr.bf16.gmra.mrb[0].mxu0 %v523
        %v893 = vpop.f32.mrb[0].mxu0
        %v894 = vadd.f32 %v797, %v893
        %v895 = vpop.f32.mrb[0].mxu0
        %v896 = vpop.f32.mrb[0].mxu0
        %v897 = vadd.f32 %v800, %v896
        %v898 = vpop.f32.mrb[0].mxu0
        %899 = vmatprep.mubr.bf16.mxu0 0
        %900 = vmatmul.mubr.bf16.gmra.mrb[0].mxu0 %v526
        %v901 = vpop.f32.mrb[0].mxu0
        %v902 = vadd.f32 %v805, %v901
        %v903 = vpop.f32.mrb[0].mxu0
        %v904 = vpop.f32.mrb[0].mxu0
        %v905 = vadd.f32 %v808, %v904
        %v906 = vpop.f32.mrb[0].mxu0
        %907 = vmatprep.mubr.bf16.mxu0 0
        %908 = vmatmul.mubr.bf16.gmra.mrb[0].mxu0 %v529
        %v909 = vpop.f32.mrb[0].mxu0
        %v910 = vadd.f32 %v813, %v909
        %v911 = vpop.f32.mrb[0].mxu0
        %v912 = vpop.f32.mrb[0].mxu0
        %v913 = vadd.f32 %v816, %v912
        %v914 = vpop.f32.mrb[0].mxu0
        %915 = vdwg.mxu0
        %v916 = vld [vmem:[%s2] sm:$0x1]
        %v918 = vlaneseq
        %v919 = vshrl.u32 %v918, 7
        %v920 = vsub.s32 0, %v919
        %v921 = vrot.slane %v916, %v920
        %v923 = vmul.f32 %v854, %v921
        %v924 = vmul.f32 %v857, %v921
        %v925 = vmul.f32 %v862, %v921
        %v926 = vmul.f32 %v865, %v921
        %v927 = vmul.f32 %v870, %v921
        %v928 = vmul.f32 %v873, %v921
        %v929 = vmul.f32 %v878, %v921
        %v930 = vmul.f32 %v881, %v921
        %v931 = vmul.f32 %v886, %v921
        %v932 = vmul.f32 %v889, %v921
        %v933 = vmul.f32 %v894, %v921
        %v934 = vmul.f32 %v897, %v921
        %v935 = vmul.f32 %v902, %v921
        %v936 = vmul.f32 %v905, %v921
        %v937 = vmul.f32 %v910, %v921
        %v938 = vmul.f32 %v913, %v921
        %v939 = vld [vmem:[%s3] sm:$0x1]
        %v941 = vlaneseq
        %v942 = vshrl.u32 %v941, 7
        %v943 = vsub.s32 0, %v942
        %v944 = vrot.slane %v939, %v943
        %v946 = vadd.f32 %v923, %v944
        %v947 = vadd.f32 %v924, %v944
        %v948 = vadd.f32 %v925, %v944
        %v949 = vadd.f32 %v926, %v944
        %v950 = vadd.f32 %v927, %v944
        %v951 = vadd.f32 %v928, %v944
        %v952 = vadd.f32 %v929, %v944
        %v953 = vadd.f32 %v930, %v944
        %v954 = vadd.f32 %v931, %v944
        %v955 = vadd.f32 %v932, %v944
        %v956 = vadd.f32 %v933, %v944
        %v957 = vadd.f32 %v934, %v944
        %v958 = vadd.f32 %v935, %v944
        %v959 = vadd.f32 %v936, %v944
        %v960 = vadd.f32 %v937, %v944
        %v961 = vadd.f32 %v938, %v944
        %v962 = vmax.f32 %v946, 0.0
        %v963 = vmax.f32 %v947, 0.0
        %v964 = vmax.f32 %v948, 0.0
        %v965 = vmax.f32 %v949, 0.0
        %v966 = vmax.f32 %v950, 0.0
        %v967 = vmax.f32 %v951, 0.0
        %v968 = vmax.f32 %v952, 0.0
        %v969 = vmax.f32 %v953, 0.0
        %v970 = vmax.f32 %v954, 0.0
        %v971 = vmax.f32 %v955, 0.0
        %v972 = vmax.f32 %v956, 0.0
        %v973 = vmax.f32 %v957, 0.0
        %v974 = vmax.f32 %v958, 0.0
        %v975 = vmax.f32 %v959, 0.0
        %v976 = vmax.f32 %v960, 0.0
        %v977 = vmax.f32 %v961, 0.0
        %v978 = vrot.slane %v962, 7
        %v979 = vrot.slane %v963, 7
        %v980 = vsel %vm341, %v978, %v979
        %v981 = vsel %vm341, %v979, %v978
        %v982 = vsel %vm333, %v981, 0.0
        %v983 = vsel %vm334, %v980, 0.0
        %v984 = vpack.c.bf16 %v983, %v982
        %985 = vst [vmem:[#allocation2] sm:$0xff] %v984
        %v986 = vpack.c.bf16 %v963, %v962
        %987 = vst [vmem:[#allocation2 + $0x8] sm:$0xff] %v986
        %v988 = vrot.slane %v962, 1
        %v989 = vrot.slane %v963, 1
        %v990 = vsel %vm352, %v988, %v989
        %v991 = vsel %vm352, %v989, %v988
        %v992 = vsel %vm335, %v990, 0.0
        %v993 = vsel %vm336, %v991, 0.0
        %v994 = vpack.c.bf16 %v993, %v992
        %995 = vst [vmem:[#allocation2 + $0x10] sm:$0xff] %v994
        %v996 = vrot.slane %v964, 7
        %v997 = vrot.slane %v965, 7
        %v998 = vsel %vm341, %v996, %v997
        %v999 = vsel %vm341, %v997, %v996
        %v1000 = vsel %vm333, %v999, 0.0
        %v1001 = vsel %vm334, %v998, 0.0
        %v1002 = vpack.c.bf16 %v1001, %v1000
        %1003 = vst [vmem:[#allocation2 + $0x18] sm:$0xff] %v1002
        %v1004 = vpack.c.bf16 %v965, %v964
        %1005 = vst [vmem:[#allocation2 + $0x20] sm:$0xff] %v1004
        %v1006 = vrot.slane %v964, 1
        %v1007 = vrot.slane %v965, 1
        %v1008 = vsel %vm352, %v1006, %v1007
        %v1009 = vsel %vm352, %v1007, %v1006
        %v1010 = vsel %vm335, %v1008, 0.0
        %v1011 = vsel %vm336, %v1009, 0.0
        %v1012 = vpack.c.bf16 %v1011, %v1010
        %1013 = vst [vmem:[#allocation2 + $0x28] sm:$0xff] %v1012
        %v1014 = vrot.slane %v966, 7
        %v1015 = vrot.slane %v967, 7
        %v1016 = vsel %vm341, %v1014, %v1015
        %v1017 = vsel %vm341, %v1015, %v1014
        %v1018 = vsel %vm333, %v1017, 0.0
        %v1019 = vsel %vm334, %v1016, 0.0
        %v1020 = vpack.c.bf16 %v1019, %v1018
        %1021 = vst [vmem:[#allocation2 + $0x30] sm:$0xff] %v1020
        %v1022 = vpack.c.bf16 %v967, %v966
        %1023 = vst [vmem:[#allocation2 + $0x38] sm:$0xff] %v1022
        %v1024 = vrot.slane %v966, 1
        %v1025 = vrot.slane %v967, 1
        %v1026 = vsel %vm352, %v1024, %v1025
        %v1027 = vsel %vm352, %v1025, %v1024
        %v1028 = vsel %vm335, %v1026, 0.0
        %v1029 = vsel %vm336, %v1027, 0.0
        %v1030 = vpack.c.bf16 %v1029, %v1028
        %1031 = vst [vmem:[#allocation2 + $0x40] sm:$0xff] %v1030
        %v1032 = vrot.slane %v968, 7
        %v1033 = vrot.slane %v969, 7
        %v1034 = vsel %vm341, %v1032, %v1033
        %v1035 = vsel %vm341, %v1033, %v1032
        %v1036 = vsel %vm333, %v1035, 0.0
        %v1037 = vsel %vm334, %v1034, 0.0
        %v1038 = vpack.c.bf16 %v1037, %v1036
        %1039 = vst [vmem:[#allocation2 + $0x48] sm:$0xff] %v1038
        %v1040 = vpack.c.bf16 %v969, %v968
        %1041 = vst [vmem:[#allocation2 + $0x50] sm:$0xff] %v1040
        %v1042 = vrot.slane %v968, 1
        %v1043 = vrot.slane %v969, 1
        %v1044 = vsel %vm352, %v1042, %v1043
        %v1045 = vsel %vm352, %v1043, %v1042
        %v1046 = vsel %vm335, %v1044, 0.0
        %v1047 = vsel %vm336, %v1045, 0.0
        %v1048 = vpack.c.bf16 %v1047, %v1046
        %1049 = vst [vmem:[#allocation2 + $0x58] sm:$0xff] %v1048
        %v1050 = vrot.slane %v970, 7
        %v1051 = vrot.slane %v971, 7
        %v1052 = vsel %vm341, %v1050, %v1051
        %v1053 = vsel %vm341, %v1051, %v1050
        %v1054 = vsel %vm333, %v1053, 0.0
        %v1055 = vsel %vm334, %v1052, 0.0
        %v1056 = vpack.c.bf16 %v1055, %v1054
        %1057 = vst [vmem:[#allocation2 + $0x60] sm:$0xff] %v1056
        %v1058 = vpack.c.bf16 %v971, %v970
        %1059 = vst [vmem:[#allocation2 + $0x68] sm:$0xff] %v1058
        %v1060 = vrot.slane %v970, 1
        %v1061 = vrot.slane %v971, 1
        %v1062 = vsel %vm352, %v1060, %v1061
        %v1063 = vsel %vm352, %v1061, %v1060
        %v1064 = vsel %vm335, %v1062, 0.0
        %v1065 = vsel %vm336, %v1063, 0.0
        %v1066 = vpack.c.bf16 %v1065, %v1064
        %1067 = vst [vmem:[#allocation2 + $0x70] sm:$0xff] %v1066
        %v1068 = vrot.slane %v972, 7
        %v1069 = vrot.slane %v973, 7
        %v1070 = vsel %vm341, %v1068, %v1069
        %v1071 = vsel %vm341, %v1069, %v1068
        %v1072 = vsel %vm333, %v1071, 0.0
        %v1073 = vsel %vm334, %v1070, 0.0
        %v1074 = vpack.c.bf16 %v1073, %v1072
        %1075 = vst [vmem:[#allocation2 + $0x78] sm:$0xff] %v1074
        %v1076 = vpack.c.bf16 %v973, %v972
        %1077 = vst [vmem:[#allocation2 + $0x80] sm:$0xff] %v1076
        %v1078 = vrot.slane %v972, 1
        %v1079 = vrot.slane %v973, 1
        %v1080 = vsel %vm352, %v1078, %v1079
        %v1081 = vsel %vm352, %v1079, %v1078
        %v1082 = vsel %vm335, %v1080, 0.0
        %v1083 = vsel %vm336, %v1081, 0.0
        %v1084 = vpack.c.bf16 %v1083, %v1082
        %1085 = vst [vmem:[#allocation2 + $0x88] sm:$0xff] %v1084
        %v1086 = vrot.slane %v974, 7
        %v1087 = vrot.slane %v975, 7
        %v1088 = vsel %vm341, %v1086, %v1087
        %v1089 = vsel %vm341, %v1087, %v1086
        %v1090 = vsel %vm333, %v1089, 0.0
        %v1091 = vsel %vm334, %v1088, 0.0
        %v1092 = vpack.c.bf16 %v1091, %v1090
        %1093 = vst [vmem:[#allocation2 + $0x90] sm:$0xff] %v1092
        %v1094 = vpack.c.bf16 %v975, %v974
        %1095 = vst [vmem:[#allocation2 + $0x98] sm:$0xff] %v1094
        %v1096 = vrot.slane %v974, 1
        %v1097 = vrot.slane %v975, 1
        %v1098 = vsel %vm352, %v1096, %v1097
        %v1099 = vsel %vm352, %v1097, %v1096
        %v1100 = vsel %vm335, %v1098, 0.0
        %v1101 = vsel %vm336, %v1099, 0.0
        %v1102 = vpack.c.bf16 %v1101, %v1100
        %1103 = vst [vmem:[#allocation2 + $0xa0] sm:$0xff] %v1102
        %v1104 = vrot.slane %v976, 7
        %v1105 = vrot.slane %v977, 7
        %v1106 = vsel %vm341, %v1104, %v1105
        %v1107 = vsel %vm341, %v1105, %v1104
        %v1108 = vsel %vm333, %v1107, 0.0
        %v1109 = vsel %vm334, %v1106, 0.0
        %v1110 = vpack.c.bf16 %v1109, %v1108
        %1111 = vst [vmem:[#allocation2 + $0xa8] sm:$0xff] %v1110
        %v1112 = vpack.c.bf16 %v977, %v976
        %1113 = vst [vmem:[#allocation2 + $0xb0] sm:$0xff] %v1112
        %v1114 = vrot.slane %v976, 1
        %v1115 = vrot.slane %v977, 1
        %v1116 = vsel %vm352, %v1114, %v1115
        %v1117 = vsel %vm352, %v1115, %v1114
        %v1118 = vsel %vm335, %v1116, 0.0
        %v1119 = vsel %vm336, %v1117, 0.0
        %v1120 = vpack.c.bf16 %v1119, %v1118
        %1121 = vst [vmem:[#allocation2 + $0xb8] sm:$0xff] %v1120
        %v1122 = vld [vmem:[#allocation2] sm:$0xff]
        %v1123 = vld [vmem:[#allocation2 + $0x8] sm:$0xff]
        %v1124 = vld [vmem:[#allocation2 + $0x10] sm:$0xff]
        %v1125 = vld [vmem:[#allocation2 + $0x18] sm:$0xff]
        %v1126 = vld [vmem:[#allocation2 + $0x20] sm:$0xff]
        %v1127 = vld [vmem:[#allocation2 + $0x28] sm:$0xff]
        %v1128 = vld [vmem:[#allocation2 + $0x30] sm:$0xff]
        %v1129 = vld [vmem:[#allocation2 + $0x38] sm:$0xff]
        %v1130 = vld [vmem:[#allocation2 + $0x40] sm:$0xff]
        %v1131 = vld [vmem:[#allocation2 + $0x48] sm:$0xff]
        %v1132 = vld [vmem:[#allocation2 + $0x50] sm:$0xff]
        %v1133 = vld [vmem:[#allocation2 + $0x58] sm:$0xff]
        %v1134 = vld [vmem:[#allocation2 + $0x60] sm:$0xff]
        %v1135 = vld [vmem:[#allocation2 + $0x68] sm:$0xff]
        %v1136 = vld [vmem:[#allocation2 + $0x70] sm:$0xff]
        %v1137 = vld [vmem:[#allocation2 + $0x78] sm:$0xff]
        %v1138 = vld [vmem:[#allocation2 + $0x80] sm:$0xff]
        %v1139 = vld [vmem:[#allocation2 + $0x88] sm:$0xff]
        %v1140 = vld [vmem:[#allocation2 + $0x90] sm:$0xff]
        %v1141 = vld [vmem:[#allocation2 + $0x98] sm:$0xff]
        %v1142 = vld [vmem:[#allocation2 + $0xa0] sm:$0xff]
        %v1143 = vld [vmem:[#allocation2 + $0xa8] sm:$0xff]
        %v1144 = vld [vmem:[#allocation2 + $0xb0] sm:$0xff]
        %v1145 = vld [vmem:[#allocation2 + $0xb8] sm:$0xff]
        %v1146 = vld [vmem:[#allocation8] sm:$0xf]
        %v1147 = vld [vmem:[#allocation8 + $0x4] sm:$0xf]
        %v1148 = vld [vmem:[#allocation8 + $0x8] sm:$0xf]
        %v1149 = vld [vmem:[#allocation8 + $0xc] sm:$0xf]
        %v1150 = vld [vmem:[#allocation8 + $0x10] sm:$0xf]
        %v1151 = vld [vmem:[#allocation8 + $0x14] sm:$0xf]
        %v1152 = vld [vmem:[#allocation8 + $0x18] sm:$0xf]
        %v1153 = vld [vmem:[#allocation8 + $0x1c] sm:$0xf]
        %v1154 = vld [vmem:[#allocation8 + $0x20] sm:$0xf]
        %v1155 = vld [vmem:[#allocation8 + $0x24] sm:$0xf]
        %v1156 = vld [vmem:[#allocation8 + $0x28] sm:$0xf]
        %v1157 = vld [vmem:[#allocation8 + $0x2c] sm:$0xf]
        %v1158 = vld [vmem:[#allocation8 + $0x30] sm:$0xf]
        %v1159 = vld [vmem:[#allocation8 + $0x34] sm:$0xf]
        %v1160 = vld [vmem:[#allocation8 + $0x38] sm:$0xf]
        %v1161 = vld [vmem:[#allocation8 + $0x3c] sm:$0xf]
        %v1162 = vld [vmem:[#allocation8 + $0x40] sm:$0xf]
        %v1163 = vld [vmem:[#allocation8 + $0x44] sm:$0xf]
        %v1164 = vld [vmem:[#allocation8 + $0x48] sm:$0xf]
        %v1165 = vld [vmem:[#allocation8 + $0x4c] sm:$0xf]
        %v1166 = vld [vmem:[#allocation8 + $0x50] sm:$0xf]
        %v1167 = vld [vmem:[#allocation8 + $0x54] sm:$0xf]
        %v1168 = vld [vmem:[#allocation8 + $0x58] sm:$0xf]
        %v1169 = vld [vmem:[#allocation8 + $0x5c] sm:$0xf]
        %v1170 = vld [vmem:[#allocation8 + $0x60] sm:$0xf]
        %v1171 = vld [vmem:[#allocation8 + $0x64] sm:$0xf]
        %v1172 = vld [vmem:[#allocation8 + $0x68] sm:$0xf]
        %v1173 = vld [vmem:[#allocation8 + $0x6c] sm:$0xf]
        %v1174 = vld [vmem:[#allocation8 + $0x70] sm:$0xf]
        %v1175 = vld [vmem:[#allocation8 + $0x74] sm:$0xf]
        %v1176 = vld [vmem:[#allocation8 + $0x78] sm:$0xf]
        %v1177 = vld [vmem:[#allocation8 + $0x7c] sm:$0xf]
        %v1178 = vld [vmem:[#allocation8 + $0x80] sm:$0xf]
        %v1179 = vld [vmem:[#allocation8 + $0x84] sm:$0xf]
        %v1180 = vld [vmem:[#allocation8 + $0x88] sm:$0xf]
        %v1181 = vld [vmem:[#allocation8 + $0x8c] sm:$0xf]
        %v1182 = vld [vmem:[#allocation8 + $0x90] sm:$0xf]
        %v1183 = vld [vmem:[#allocation8 + $0x94] sm:$0xf]
        %v1184 = vld [vmem:[#allocation8 + $0x98] sm:$0xf]
        %v1185 = vld [vmem:[#allocation8 + $0x9c] sm:$0xf]
        %v1186 = vld [vmem:[#allocation8 + $0xa0] sm:$0xf]
        %v1187 = vld [vmem:[#allocation8 + $0xa4] sm:$0xf]
        %v1188 = vld [vmem:[#allocation8 + $0xa8] sm:$0xf]
        %v1189 = vld [vmem:[#allocation8 + $0xac] sm:$0xf]
        %v1190 = vld [vmem:[#allocation8 + $0xb0] sm:$0xf]
        %v1191 = vld [vmem:[#allocation8 + $0xb4] sm:$0xf]
        %v1192 = vld [vmem:[#allocation8 + $0xb8] sm:$0xf]
        %v1193 = vld [vmem:[#allocation8 + $0xbc] sm:$0xf]
        %v1242 = vunpack.c.l.b16 %v1146
        %v1243 = vunpack.c.l.b16 %v1147
        %v1244 = vunpack.c.l.b16 %v1148
        %v1245 = vunpack.c.l.b16 %v1149
        %v1246 = vunpack.c.l.b16 %v1150
        %v1247 = vunpack.c.l.b16 %v1151
        %v1248 = vunpack.c.l.b16 %v1152
        %v1249 = vunpack.c.l.b16 %v1153
        %v1250 = vunpack.c.l.b16 %v1154
        %v1251 = vunpack.c.l.b16 %v1155
        %v1252 = vunpack.c.l.b16 %v1156
        %v1253 = vunpack.c.l.b16 %v1157
        %v1254 = vunpack.c.l.b16 %v1158
        %v1255 = vunpack.c.l.b16 %v1159
        %v1256 = vunpack.c.l.b16 %v1160
        %v1257 = vunpack.c.l.b16 %v1161
        %v1258 = vunpack.c.l.b16 %v1162
        %v1259 = vunpack.c.l.b16 %v1163
        %v1260 = vunpack.c.l.b16 %v1164
        %v1261 = vunpack.c.l.b16 %v1165
        %v1262 = vunpack.c.l.b16 %v1166
        %v1263 = vunpack.c.l.b16 %v1167
        %v1264 = vunpack.c.l.b16 %v1168
        %v1265 = vunpack.c.l.b16 %v1169
        %v1266 = vunpack.c.l.b16 %v1170
        %v1267 = vunpack.c.l.b16 %v1171
        %v1268 = vunpack.c.l.b16 %v1172
        %v1269 = vunpack.c.l.b16 %v1173
        %v1270 = vunpack.c.l.b16 %v1174
        %v1271 = vunpack.c.l.b16 %v1175
        %v1272 = vunpack.c.l.b16 %v1176
        %v1273 = vunpack.c.l.b16 %v1177
        %v1274 = vunpack.c.l.b16 %v1178
        %v1275 = vunpack.c.l.b16 %v1179
        %v1276 = vunpack.c.l.b16 %v1180
        %v1277 = vunpack.c.l.b16 %v1181
        %v1278 = vunpack.c.l.b16 %v1182
        %v1279 = vunpack.c.l.b16 %v1183
        %v1280 = vunpack.c.l.b16 %v1184
        %v1281 = vunpack.c.l.b16 %v1185
        %v1282 = vunpack.c.l.b16 %v1186
        %v1283 = vunpack.c.l.b16 %v1187
        %v1284 = vunpack.c.l.b16 %v1188
        %v1285 = vunpack.c.l.b16 %v1189
        %v1286 = vunpack.c.l.b16 %v1190
        %v1287 = vunpack.c.l.b16 %v1191
        %v1288 = vunpack.c.l.b16 %v1192
        %v1289 = vunpack.c.l.b16 %v1193
        %v1290 = vpack.c.b16 %v1243, %v1242
        %v1291 = vpack.c.b16 %v1245, %v1244
        %v1292 = vpack.c.b16 %v1247, %v1246
        %v1293 = vpack.c.b16 %v1249, %v1248
        %v1294 = vpack.c.b16 %v1251, %v1250
        %v1295 = vpack.c.b16 %v1253, %v1252
        %v1296 = vpack.c.b16 %v1255, %v1254
        %v1297 = vpack.c.b16 %v1257, %v1256
        %v1298 = vpack.c.b16 %v1259, %v1258
        %v1299 = vpack.c.b16 %v1261, %v1260
        %v1300 = vpack.c.b16 %v1263, %v1262
        %v1301 = vpack.c.b16 %v1265, %v1264
        %v1302 = vpack.c.b16 %v1267, %v1266
        %v1303 = vpack.c.b16 %v1269, %v1268
        %v1304 = vpack.c.b16 %v1271, %v1270
        %v1305 = vpack.c.b16 %v1273, %v1272
        %v1306 = vpack.c.b16 %v1275, %v1274
        %v1307 = vpack.c.b16 %v1277, %v1276
        %v1308 = vpack.c.b16 %v1279, %v1278
        %v1309 = vpack.c.b16 %v1281, %v1280
        %v1310 = vpack.c.b16 %v1283, %v1282
        %v1311 = vpack.c.b16 %v1285, %v1284
        %v1312 = vpack.c.b16 %v1287, %v1286
        %v1313 = vpack.c.b16 %v1289, %v1288
        %1338 = vmatprep.subr.bf16.mxu0 0
        %1339 = vmatpush1.bf16.msra.mxu0 %v1290
        %1340 = vmatprep.subr.bf16.mxu0 0
        %1341 = vmatpush1.bf16.msra.mxu0 %v1291
        %1342 = vmatprep.subr.bf16.mxu0 0
        %1343 = vmatpush1.bf16.msra.mxu0 %v1292
        %1344 = vmatprep.subr.bf16.mxu0 0
        %1345 = vmatpush1.bf16.msra.mxu0 %v1293
        %1346 = vmatprep.subr.bf16.mxu0 0
        %1347 = vmatpush1.bf16.msra.mxu0 %v1294
        %1348 = vmatprep.subr.bf16.mxu0 0
        %1349 = vmatpush1.bf16.msra.mxu0 %v1295
        %1350 = vmatprep.subr.bf16.mxu0 0
        %1351 = vmatpush1.bf16.msra.mxu0 %v1296
        %1352 = vmatprep.subr.bf16.mxu0 0
        %1353 = vmatpush1.bf16.msra.mxu0 %v1297
        %1354 = vmatprep.subr.bf16.mxu0 0
        %1355 = vmatpush1.bf16.msra.mxu0 %v1298
        %1356 = vmatprep.subr.bf16.mxu0 0
        %1357 = vmatpush1.bf16.msra.mxu0 %v1299
        %1358 = vmatprep.subr.bf16.mxu0 0
        %1359 = vmatpush1.bf16.msra.mxu0 %v1300
        %1360 = vmatprep.subr.bf16.mxu0 0
        %1361 = vmatpush1.bf16.msra.mxu0 %v1301
        %1362 = vmatprep.subr.bf16.mxu0 0
        %1363 = vmatpush1.bf16.msra.mxu0 %v1302
        %1364 = vmatprep.subr.bf16.mxu0 0
        %1365 = vmatpush1.bf16.msra.mxu0 %v1303
        %1366 = vmatprep.subr.bf16.mxu0 0
        %1367 = vmatpush1.bf16.msra.mxu0 %v1304
        %1368 = vmatprep.subr.bf16.mxu0 0
        %1369 = vmatpush1.bf16.msra.mxu0 %v1305
        %1370 = vmatprep.mubr.bf16.mxu0 %v1123
        %1371 = vmatmul.mubr.bf16.gmra.mrb[0].mxu0 %v1122
        %v1372 = vpop.f32.mrb[0].mxu0
        %v1373 = vadd.f32 0.0, %v1372
        %v1374 = vpop.f32.mrb[0].mxu0
        %v1375 = vpop.f32.mrb[0].mxu0
        %v1376 = vadd.f32 0.0, %v1375
        %v1377 = vpop.f32.mrb[0].mxu0
        %1378 = vmatprep.mubr.bf16.mxu0 %v1126
        %1379 = vmatmul.mubr.bf16.gmra.mrb[0].mxu0 %v1125
        %v1380 = vpop.f32.mrb[0].mxu0
        %v1381 = vadd.f32 0.0, %v1380
        %v1382 = vpop.f32.mrb[0].mxu0
        %v1383 = vpop.f32.mrb[0].mxu0
        %v1384 = vadd.f32 0.0, %v1383
        %v1385 = vpop.f32.mrb[0].mxu0
        %1386 = vmatprep.mubr.bf16.mxu0 %v1129
        %1387 = vmatmul.mubr.bf16.gmra.mrb[0].mxu0 %v1128
        %v1388 = vpop.f32.mrb[0].mxu0
        %v1389 = vadd.f32 0.0, %v1388
        %v1390 = vpop.f32.mrb[0].mxu0
        %v1391 = vpop.f32.mrb[0].mxu0
        %v1392 = vadd.f32 0.0, %v1391
        %v1393 = vpop.f32.mrb[0].mxu0
        %1394 = vmatprep.mubr.bf16.mxu0 %v1132
        %1395 = vmatmul.mubr.bf16.gmra.mrb[0].mxu0 %v1131
        %v1396 = vpop.f32.mrb[0].mxu0
        %v1397 = vadd.f32 0.0, %v1396
        %v1398 = vpop.f32.mrb[0].mxu0
        %v1399 = vpop.f32.mrb[0].mxu0
        %v1400 = vadd.f32 0.0, %v1399
        %v1401 = vpop.f32.mrb[0].mxu0
        %1402 = vmatprep.mubr.bf16.mxu0 %v1135
        %1403 = vmatmul.mubr.bf16.gmra.mrb[0].mxu0 %v1134
        %v1404 = vpop.f32.mrb[0].mxu0
        %v1405 = vadd.f32 0.0, %v1404
        %v1406 = vpop.f32.mrb[0].mxu0
        %v1407 = vpop.f32.mrb[0].mxu0
        %v1408 = vadd.f32 0.0, %v1407
        %v1409 = vpop.f32.mrb[0].mxu0
        %1410 = vmatprep.mubr.bf16.mxu0 %v1138
        %1411 = vmatmul.mubr.bf16.gmra.mrb[0].mxu0 %v1137
        %v1412 = vpop.f32.mrb[0].mxu0
        %v1413 = vadd.f32 0.0, %v1412
        %v1414 = vpop.f32.mrb[0].mxu0
        %v1415 = vpop.f32.mrb[0].mxu0
        %v1416 = vadd.f32 0.0, %v1415
        %v1417 = vpop.f32.mrb[0].mxu0
        %1418 = vmatprep.mubr.bf16.mxu0 %v1141
        %1419 = vmatmul.mubr.bf16.gmra.mrb[0].mxu0 %v1140
        %v1420 = vpop.f32.mrb[0].mxu0
        %v1421 = vadd.f32 0.0, %v1420
        %v1422 = vpop.f32.mrb[0].mxu0
        %v1423 = vpop.f32.mrb[0].mxu0
        %v1424 = vadd.f32 0.0, %v1423
        %v1425 = vpop.f32.mrb[0].mxu0
        %1426 = vmatprep.mubr.bf16.mxu0 %v1144
        %1427 = vmatmul.mubr.bf16.gmra.mrb[0].mxu0 %v1143
        %v1428 = vpop.f32.mrb[0].mxu0
        %v1429 = vadd.f32 0.0, %v1428
        %v1430 = vpop.f32.mrb[0].mxu0
        %v1431 = vpop.f32.mrb[0].mxu0
        %v1432 = vadd.f32 0.0, %v1431
        %v1433 = vpop.f32.mrb[0].mxu0
        %1434 = vdwg.mxu0
        %1435 = vmatprep.subr.bf16.mxu0 0
        %1436 = vmatpush1.bf16.msra.mxu0 %v1306
        %1437 = vmatprep.subr.bf16.mxu0 0
        %1438 = vmatpush1.bf16.msra.mxu0 %v1307
        %1439 = vmatprep.subr.bf16.mxu0 0
        %1440 = vmatpush1.bf16.msra.mxu0 %v1308
        %1441 = vmatprep.subr.bf16.mxu0 0
        %1442 = vmatpush1.bf16.msra.mxu0 %v1309
        %1443 = vmatprep.subr.bf16.mxu0 0
        %1444 = vmatpush1.bf16.msra.mxu0 %v1310
        %1445 = vmatprep.subr.bf16.mxu0 0
        %1446 = vmatpush1.bf16.msra.mxu0 %v1311
        %1447 = vmatprep.subr.bf16.mxu0 0
        %1448 = vmatpush1.bf16.msra.mxu0 %v1312
        %1449 = vmatprep.subr.bf16.mxu0 0
        %1450 = vmatpush1.bf16.msra.mxu0 %v1313
        %1451 = vmatprep.subr.bf16.mxu0 0
        %1452 = vmatpush1.bf16.msra.mxu0 0
        %1453 = vmatprep.subr.bf16.mxu0 0
        %1454 = vmatpush1.bf16.msra.mxu0 0
        %1455 = vmatprep.subr.bf16.mxu0 0
        %1456 = vmatpush1.bf16.msra.mxu0 0
        %1457 = vmatprep.subr.bf16.mxu0 0
        %1458 = vmatpush1.bf16.msra.mxu0 0
        %1459 = vmatprep.subr.bf16.mxu0 0
        %1460 = vmatpush1.bf16.msra.mxu0 0
        %1461 = vmatprep.subr.bf16.mxu0 0
        %1462 = vmatpush1.bf16.msra.mxu0 0
        %1463 = vmatprep.subr.bf16.mxu0 0
        %1464 = vmatpush1.bf16.msra.mxu0 0
        %1465 = vmatprep.subr.bf16.mxu0 0
        %1466 = vmatpush1.bf16.msra.mxu0 0
        %1467 = vmatprep.mubr.bf16.mxu0 0
        %1468 = vmatmul.mubr.bf16.gmra.mrb[0].mxu0 %v1124
        %v1469 = vpop.f32.mrb[0].mxu0
        %v1470 = vadd.f32 %v1373, %v1469
        %v1471 = vpop.f32.mrb[0].mxu0
        %v1472 = vpop.f32.mrb[0].mxu0
        %v1473 = vadd.f32 %v1376, %v1472
        %v1474 = vpop.f32.mrb[0].mxu0
        %1475 = vmatprep.mubr.bf16.mxu0 0
        %1476 = vmatmul.mubr.bf16.gmra.mrb[0].mxu0 %v1127
        %v1477 = vpop.f32.mrb[0].mxu0
        %v1478 = vadd.f32 %v1381, %v1477
        %v1479 = vpop.f32.mrb[0].mxu0
        %v1480 = vpop.f32.mrb[0].mxu0
        %v1481 = vadd.f32 %v1384, %v1480
        %v1482 = vpop.f32.mrb[0].mxu0
        %1483 = vmatprep.mubr.bf16.mxu0 0
        %1484 = vmatmul.mubr.bf16.gmra.mrb[0].mxu0 %v1130
        %v1485 = vpop.f32.mrb[0].mxu0
        %v1486 = vadd.f32 %v1389, %v1485
        %v1487 = vpop.f32.mrb[0].mxu0
        %v1488 = vpop.f32.mrb[0].mxu0
        %v1489 = vadd.f32 %v1392, %v1488
        %v1490 = vpop.f32.mrb[0].mxu0
        %1491 = vmatprep.mubr.bf16.mxu0 0
        %1492 = vmatmul.mubr.bf16.gmra.mrb[0].mxu0 %v1133
        %v1493 = vpop.f32.mrb[0].mxu0
        %v1494 = vadd.f32 %v1397, %v1493
        %v1495 = vpop.f32.mrb[0].mxu0
        %v1496 = vpop.f32.mrb[0].mxu0
        %v1497 = vadd.f32 %v1400, %v1496
        %v1498 = vpop.f32.mrb[0].mxu0
        %1499 = vmatprep.mubr.bf16.mxu0 0
        %1500 = vmatmul.mubr.bf16.gmra.mrb[0].mxu0 %v1136
        %v1501 = vpop.f32.mrb[0].mxu0
        %v1502 = vadd.f32 %v1405, %v1501
        %v1503 = vpop.f32.mrb[0].mxu0
        %v1504 = vpop.f32.mrb[0].mxu0
        %v1505 = vadd.f32 %v1408, %v1504
        %v1506 = vpop.f32.mrb[0].mxu0
        %1507 = vmatprep.mubr.bf16.mxu0 0
        %1508 = vmatmul.mubr.bf16.gmra.mrb[0].mxu0 %v1139
        %v1509 = vpop.f32.mrb[0].mxu0
        %v1510 = vadd.f32 %v1413, %v1509
        %v1511 = vpop.f32.mrb[0].mxu0
        %v1512 = vpop.f32.mrb[0].mxu0
        %v1513 = vadd.f32 %v1416, %v1512
        %v1514 = vpop.f32.mrb[0].mxu0
        %1515 = vmatprep.mubr.bf16.mxu0 0
        %1516 = vmatmul.mubr.bf16.gmra.mrb[0].mxu0 %v1142
        %v1517 = vpop.f32.mrb[0].mxu0
        %v1518 = vadd.f32 %v1421, %v1517
        %v1519 = vpop.f32.mrb[0].mxu0
        %v1520 = vpop.f32.mrb[0].mxu0
        %v1521 = vadd.f32 %v1424, %v1520
        %v1522 = vpop.f32.mrb[0].mxu0
        %1523 = vmatprep.mubr.bf16.mxu0 0
        %1524 = vmatmul.mubr.bf16.gmra.mrb[0].mxu0 %v1145
        %v1525 = vpop.f32.mrb[0].mxu0
        %v1526 = vadd.f32 %v1429, %v1525
        %v1527 = vpop.f32.mrb[0].mxu0
        %v1528 = vpop.f32.mrb[0].mxu0
        %v1529 = vadd.f32 %v1432, %v1528
        %v1530 = vpop.f32.mrb[0].mxu0
        %1531 = vdwg.mxu0
        %v1532 = vld [vmem:[%s288] sm:$0xff]
        %v1533 = vld [vmem:[%s288 + $0x8] sm:$0xff]
        %v1534 = vld [vmem:[%s288 + $0x10] sm:$0xff]
        %v1535 = vld [vmem:[%s288 + $0x18] sm:$0xff]
        %v1536 = vld [vmem:[%s288 + $0x20] sm:$0xff]
        %v1537 = vld [vmem:[%s288 + $0x28] sm:$0xff]
        %v1538 = vld [vmem:[%s288 + $0x30] sm:$0xff]
        %v1539 = vld [vmem:[%s288 + $0x38] sm:$0xff]
        %v1540 = vld [vmem:[%s288 + $0x40] sm:$0xff]
        %v1541 = vld [vmem:[%s288 + $0x48] sm:$0xff]
        %v1542 = vld [vmem:[%s288 + $0x50] sm:$0xff]
        %v1543 = vld [vmem:[%s288 + $0x58] sm:$0xff]
        %v1544 = vld [vmem:[%s288 + $0x60] sm:$0xff]
        %v1545 = vld [vmem:[%s288 + $0x68] sm:$0xff]
        %v1546 = vld [vmem:[%s288 + $0x70] sm:$0xff]
        %v1547 = vld [vmem:[%s288 + $0x78] sm:$0xff]
        %v1548 = vld [vmem:[%s5] sm:$0x1]
        %v1550 = vlaneseq
        %v1551 = vshrl.u32 %v1550, 7
        %v1552 = vsub.s32 0, %v1551
        %v1553 = vrot.slane %v1548, %v1552
        %v1555 = vmul.f32 %v1470, %v1553
        %v1556 = vmul.f32 %v1473, %v1553
        %v1557 = vmul.f32 %v1478, %v1553
        %v1558 = vmul.f32 %v1481, %v1553
        %v1559 = vmul.f32 %v1486, %v1553
        %v1560 = vmul.f32 %v1489, %v1553
        %v1561 = vmul.f32 %v1494, %v1553
        %v1562 = vmul.f32 %v1497, %v1553
        %v1563 = vmul.f32 %v1502, %v1553
        %v1564 = vmul.f32 %v1505, %v1553
        %v1565 = vmul.f32 %v1510, %v1553
        %v1566 = vmul.f32 %v1513, %v1553
        %v1567 = vmul.f32 %v1518, %v1553
        %v1568 = vmul.f32 %v1521, %v1553
        %v1569 = vmul.f32 %v1526, %v1553
        %v1570 = vmul.f32 %v1529, %v1553
        %v1571 = vld [vmem:[%s6] sm:$0x1]
        %v1573 = vlaneseq
        %v1574 = vshrl.u32 %v1573, 7
        %v1575 = vsub.s32 0, %v1574
        %v1576 = vrot.slane %v1571, %v1575
        %v1578 = vadd.f32 %v1555, %v1576
        %v1579 = vadd.f32 %v1556, %v1576
        %v1580 = vadd.f32 %v1557, %v1576
        %v1581 = vadd.f32 %v1558, %v1576
        %v1582 = vadd.f32 %v1559, %v1576
        %v1583 = vadd.f32 %v1560, %v1576
        %v1584 = vadd.f32 %v1561, %v1576
        %v1585 = vadd.f32 %v1562, %v1576
        %v1586 = vadd.f32 %v1563, %v1576
        %v1587 = vadd.f32 %v1564, %v1576
        %v1588 = vadd.f32 %v1565, %v1576
        %v1589 = vadd.f32 %v1566, %v1576
        %v1590 = vadd.f32 %v1567, %v1576
        %v1591 = vadd.f32 %v1568, %v1576
        %v1592 = vadd.f32 %v1569, %v1576
        %v1593 = vadd.f32 %v1570, %v1576
        %v1594 = vadd.f32 %v1578, %v1532
        %v1595 = vadd.f32 %v1579, %v1533
        %v1596 = vadd.f32 %v1580, %v1534
        %v1597 = vadd.f32 %v1581, %v1535
        %v1598 = vadd.f32 %v1582, %v1536
        %v1599 = vadd.f32 %v1583, %v1537
        %v1600 = vadd.f32 %v1584, %v1538
        %v1601 = vadd.f32 %v1585, %v1539
        %v1602 = vadd.f32 %v1586, %v1540
        %v1603 = vadd.f32 %v1587, %v1541
        %v1604 = vadd.f32 %v1588, %v1542
        %v1605 = vadd.f32 %v1589, %v1543
        %v1606 = vadd.f32 %v1590, %v1544
        %v1607 = vadd.f32 %v1591, %v1545
        %v1608 = vadd.f32 %v1592, %v1546
        %v1609 = vadd.f32 %v1593, %v1547
        %v1610 = vmax.f32 %v1594, 0.0
        %v1611 = vmax.f32 %v1595, 0.0
        %v1612 = vmax.f32 %v1596, 0.0
        %v1613 = vmax.f32 %v1597, 0.0
        %v1614 = vmax.f32 %v1598, 0.0
        %v1615 = vmax.f32 %v1599, 0.0
        %v1616 = vmax.f32 %v1600, 0.0
        %v1617 = vmax.f32 %v1601, 0.0
        %v1618 = vmax.f32 %v1602, 0.0
        %v1619 = vmax.f32 %v1603, 0.0
        %v1620 = vmax.f32 %v1604, 0.0
        %v1621 = vmax.f32 %v1605, 0.0
        %v1622 = vmax.f32 %v1606, 0.0
        %v1623 = vmax.f32 %v1607, 0.0
        %v1624 = vmax.f32 %v1608, 0.0
        %v1625 = vmax.f32 %v1609, 0.0
        %1626 = vst [vmem:[%s326] sm:$0xff] %v1610
        %1627 = vst [vmem:[%s326 + $0x8] sm:$0xff] %v1611
        %1628 = vst [vmem:[%s326 + $0x10] sm:$0xff] %v1612
        %1629 = vst [vmem:[%s326 + $0x18] sm:$0xff] %v1613
        %1630 = vst [vmem:[%s326 + $0x20] sm:$0xff] %v1614
        %1631 = vst [vmem:[%s326 + $0x28] sm:$0xff] %v1615
        %1632 = vst [vmem:[%s326 + $0x30] sm:$0xff] %v1616
        %1633 = vst [vmem:[%s326 + $0x38] sm:$0xff] %v1617
        %1634 = vst [vmem:[%s326 + $0x40] sm:$0xff] %v1618
        %1635 = vst [vmem:[%s326 + $0x48] sm:$0xff] %v1619
        %1636 = vst [vmem:[%s326 + $0x50] sm:$0xff] %v1620
        %1637 = vst [vmem:[%s326 + $0x58] sm:$0xff] %v1621
        %1638 = vst [vmem:[%s326 + $0x60] sm:$0xff] %v1622
        %1639 = vst [vmem:[%s326 + $0x68] sm:$0xff] %v1623
        %1640 = vst [vmem:[%s326 + $0x70] sm:$0xff] %v1624
        %1641 = vst [vmem:[%s326 + $0x78] sm:$0xff] %v1625
        %s1642 = sand.u32 %s185, 1
        %s1643 = scalar_lea.sflag [#allocation5], %s1642
        %s1644 = sand.u32 %s185, 1
        %s1645 = smul.addr %s1644, 128
        %s1646 = scalar_lea.vmem [#allocation9], %s1645
        // Predicated region
        $region61: #{tpu_custom_call.1} parent=47 // pred_check
          %p1647 = pneg %p195
        $region62: #{tpu_custom_call.1} parent=47 // pred_check_branch
          %1649 = sbr.rel (%p1647) target = $region64
        $region63: #{tpu_custom_call.1} parent=47 // pred_region
          %s1650 = smul.u32 8, %s25
          %s1652 = ssub.s32 2048, 2048
          %1653 = vsyncadd %s1643, %s1652
          %s1654 = smul.addr %s1650, 2
          %s1655 = smul.addr %s1654, 128
          %s1656 = scalar_lea.hbm %s7, %s1655
          %s1657 = sshll.u32 %s1646, 4
          %s1658 = int_to_ptr.vmem [resolvable:$true] %s1657
          %1663 = dma.vmem_to_hbm [thread:$0]  %s1658, 2048, %s1656, %s1643, 128, 128, 8
        $region64: #{tpu_custom_call.1} parent=47 // pred_fallthru
          _
      $region48: #{tpu_custom_call.1} parent=5 // pred_fallthru
        _
      %p1664 = scmp.le.s32.totalorder 2, %s20
      // Predicated region
      $region65: #{tpu_custom_call.1} parent=5 // pred_check
        %p1665 = pneg %p1664
      $region66: #{tpu_custom_call.1} parent=5 // pred_check_branch
        %1667 = sbr.rel (%p1665) target = $region68
      $region67: #{tpu_custom_call.1} parent=5 // pred_region
        %s1668 = ssub.s32 %s20, 2
        // Predicated region
        $region69: #{tpu_custom_call.1} parent=67 // pred_check
          %p1669 = pneg %p201
        $region70: #{tpu_custom_call.1} parent=67 // pred_check_branch
          %1671 = sbr.rel (%p1669) target = $region72
        $region71: #{tpu_custom_call.1} parent=67 // pred_region
          %s1672 = sand.u32 %s186, 1
          %s1673 = scalar_lea.sflag [#allocation5], %s1672
          %s1674 = sand.u32 %s186, 1
          %s1675 = smul.addr %s1674, 128
          %s1676 = scalar_lea.vmem [#allocation9], %s1675
          %1677 = dma.done %s1673, 2048
        $region72: #{tpu_custom_call.1} parent=67 // pred_fallthru
          _
      $region68: #{tpu_custom_call.1} parent=5 // pred_fallthru
        _
    $region6: #{tpu_custom_call.1} parent=1 // loop_footer
      %s24 = sadd.s32 1, %s20
    $region7: #{tpu_custom_call.1} parent=1 // loop_footer_branch
      %19 = sbr.rel target = $region3
    $region8: #{tpu_custom_call.1} parent=1 // loop_exit
      _
    %1678 = vsyncpa [#allocation4], 1
    %s1679 = scalar_lea.sflag [#allocation4], 1
    %1680 = vsyncpa %s1679, 1
    %1681 = vsyncpa [#allocation7], 1
    %1682 = vsyncpa [#allocation5], 1
    %s1683 = scalar_lea.sflag [#allocation5], 1
    %1684 = vsyncpa %s1683, 1

</llo_original>
